<compile_context>
chip_gen: v7x
topology: tpu7x:2x2x1
jax: 0.10.0
libtpu: 0.0.40
codegen_flags: <defaults>
</compile_context>

<pallas_src>
import functools

import jax
import jax.numpy as jnp
from jax.experimental import pallas as pl
from jax.experimental.pallas import tpu as pltpu


def _clamp_lane_tile(tn, hw):
    """Pick a legal lane tile: full extent if tn >= hw, else a multiple of 128."""
    if tn >= hw:
        return hw                      # full-extent block is always legal
    return max(128, (tn // 128) * 128)  # lane dim must be a multiple of 128


# ---------------------------------------------------------------------------
# Kernel 1: per-channel sum / sum-of-squares partials for BatchNorm stats
# ---------------------------------------------------------------------------
def _bn_stats_kernel(x_ref, sum_ref, sq_ref, *, hw):
    tn = x_ref.shape[-1]
    j = pl.program_id(1)
    # Mask out-of-bounds lanes of the (possibly ragged) last block.
    lane = jax.lax.broadcasted_iota(jnp.int32, (1, tn), 1)
    valid = (j * tn + lane) < hw
    x = jnp.where(valid, x_ref[...].astype(jnp.float32), 0.0)   # (Cin, tn)
    sum_ref[...] = jnp.sum(x, axis=-1, keepdims=True)           # (Cin, 1)
    sq_ref[...] = jnp.sum(x * x, axis=-1, keepdims=True)        # (Cin, 1)


def bn_batch_stats(x, *, tn=512):
    """x: (N, Cin, HW) f32 -> (mean, var) of shape (Cin,), biased variance."""
    N, Cin, HW = x.shape
    tn = _clamp_lane_tile(tn, HW)
    nblk = pl.cdiv(HW, tn)

    part_sum, part_sq = pl.pallas_call(
        functools.partial(_bn_stats_kernel, hw=HW),
        out_shape=(
            jax.ShapeDtypeStruct((N, nblk, Cin, 1), jnp.float32),
            jax.ShapeDtypeStruct((N, nblk, Cin, 1), jnp.float32),
        ),
        grid_spec=pltpu.PrefetchScalarGridSpec(
            num_scalar_prefetch=0,
            grid=(N, nblk),
            in_specs=[pl.BlockSpec((None, Cin, tn), lambda n, j: (n, 0, j))],
            out_specs=(
                pl.BlockSpec((None, None, Cin, 1), lambda n, j: (n, j, 0, 0)),
                pl.BlockSpec((None, None, Cin, 1), lambda n, j: (n, j, 0, 0)),
            ),
        ),
        compiler_params=pltpu.CompilerParams(
            dimension_semantics=("parallel", "parallel")
        ),
    )(x)

    count = N * HW
    total = jnp.sum(part_sum, axis=(0, 1, 3))      # (Cin,)
    total_sq = jnp.sum(part_sq, axis=(0, 1, 3))    # (Cin,)
    mean = total / count
    var = total_sq / count - mean * mean           # biased (torch training mode)
    return mean, var


# ---------------------------------------------------------------------------
# Kernel 2: fused  W @ relu(scale*x + shift + r)   (1x1 conv as matmul)
# ---------------------------------------------------------------------------
def _fused_bn_add_relu_conv_kernel(x_ref, r_ref, scale_ref, shift_ref, w_ref,
                                   o_ref):
    # x_ref, r_ref: (Cin, tn); scale/shift: (Cin, 1); w: (Cout, Cin)
    y = x_ref[...] * scale_ref[...] + shift_ref[...] + r_ref[...]
    y = jnp.maximum(y, 0.0)
    # Out-of-bounds lanes of a ragged last block only produce out-of-bounds
    # output columns, which Pallas masks on store -> no explicit masking needed.
    o_ref[...] = jnp.dot(
        w_ref[...], y, preferred_element_type=jnp.float32
    ).astype(o_ref.dtype)


def fused_bn_add_relu_conv(x, r, scale, shift, w, *, tn=512):
    """x, r: (N, Cin, HW); scale/shift: (Cin, 1); w: (Cout, Cin)."""
    N, Cin, HW = x.shape
    Cout = w.shape[0]
    tn = _clamp_lane_tile(tn, HW)
    nblk = pl.cdiv(HW, tn)

    return pl.pallas_call(
        _fused_bn_add_relu_conv_kernel,
        out_shape=jax.ShapeDtypeStruct((N, Cout, HW), jnp.float32),
        grid_spec=pltpu.PrefetchScalarGridSpec(
            num_scalar_prefetch=0,
            grid=(N, nblk),
            in_specs=[
                pl.BlockSpec((None, Cin, tn), lambda n, j: (n, 0, j)),
                pl.BlockSpec((None, Cin, tn), lambda n, j: (n, 0, j)),
                pl.BlockSpec((Cin, 1), lambda n, j: (0, 0)),
                pl.BlockSpec((Cin, 1), lambda n, j: (0, 0)),
                pl.BlockSpec((Cout, Cin), lambda n, j: (0, 0)),
            ],
            out_specs=pl.BlockSpec((None, Cout, tn), lambda n, j: (n, 0, j)),
        ),
        compiler_params=pltpu.CompilerParams(
            dimension_semantics=("parallel", "parallel")
        ),
    )(x, r, scale, shift, w)


# ---------------------------------------------------------------------------
# Module wrapper (NCHW in / NCHW out, like the torch module)
# ---------------------------------------------------------------------------
@functools.partial(jax.jit, static_argnames=("tn",))
def module_forward(x33, x26, gamma, beta, conv_w, eps=1e-5, *, tn=512):
    N, Cin, H, W = x33.shape
    Cout = conv_w.shape[0]
    HW = H * W

    # Free views (contiguous NCHW -> (N, C, H*W)); no transposes anywhere.
    x = x33.reshape(N, Cin, HW).astype(jnp.float32)
    r = x26.reshape(N, Cin, HW).astype(jnp.float32)

    # BatchNorm (training-mode) batch statistics via Pallas reduction pass.
    mean, var = bn_batch_stats(x, tn=tn)
    inv_std = jax.lax.rsqrt(var + eps)
    scale = (gamma * inv_std).reshape(Cin, 1).astype(jnp.float32)
    shift = (beta - mean * gamma * inv_std).reshape(Cin, 1).astype(jnp.float32)

    # 1x1 conv weight (Cout, Cin, 1, 1) -> (Cout, Cin) matmul operand (free).
    w = conv_w.reshape(Cout, Cin).astype(jnp.float32)

    out = fused_bn_add_relu_conv(x, r, scale, shift, w, tn=tn)  # (N, Cout, HW)
    return out.reshape(N, Cout, H, W)
    # TODO(synk): torch training-mode BN also updates running_mean/running_var;
    # that buffer side effect is not reproduced (forward tensor matches).


def reference_forward(x33, x26, gamma, beta, conv_w, eps=1e-5):
    # plain-JAX reference for sanity checking
    mean = jnp.mean(x33, axis=(0, 2, 3))
    var = jnp.mean((x33 - mean.reshape(1, -1, 1, 1)) ** 2, axis=(0, 2, 3))
    xhat = (x33 - mean.reshape(1, -1, 1, 1)) * jax.lax.rsqrt(
        var.reshape(1, -1, 1, 1) + eps
    )
    y = xhat * gamma.reshape(1, -1, 1, 1) + beta.reshape(1, -1, 1, 1)
    y = jnp.maximum(y + x26, 0.0)
    return jax.lax.conv_general_dilated(
        y, conv_w, window_strides=(1, 1), padding="VALID",
        dimension_numbers=("NCHW", "OIHW", "NCHW"),
        precision=jax.lax.Precision.HIGHEST,
    )


if __name__ == "__main__":
    # Small shapes consistent with the module (original: N=1, Cin=256,
    # Cout=512, H=W=56).  H=W=20 -> HW=400 is deliberately NOT a multiple of
    # 128 so the ragged-tail masking path is exercised.
    N, Cin, Cout, H, W = 2, 128, 256, 20, 20

    key = jax.random.PRNGKey(0)
    k1, k2, k3, k4, k5 = jax.random.split(key, 5)
    x33 = jax.random.normal(k1, (N, Cin, H, W), dtype=jnp.float32)
    x26 = jax.random.normal(k2, (N, Cin, H, W), dtype=jnp.float32)
    gamma = 1.0 + 0.1 * jax.random.normal(k3, (Cin,), dtype=jnp.float32)
    beta = 0.1 * jax.random.normal(k4, (Cin,), dtype=jnp.float32)
    conv_w = 0.05 * jax.random.normal(k5, (Cout, Cin, 1, 1), dtype=jnp.float32)

    ref = reference_forward(x33, x26, gamma, beta, conv_w)

    # Default tile (single full-extent spatial block per image).
    out = module_forward(x33, x26, gamma, beta, conv_w)
    jax.block_until_ready(out)
    assert out.shape == (N, Cout, H, W), out.shape
    assert jnp.allclose(out, ref, atol=2e-3, rtol=2e-3), float(
        jnp.max(jnp.abs(out - ref))
    )

    # Small tile -> multi-block grid with a ragged last block (tail masking).
    out_tiled = module_forward(x33, x26, gamma, beta, conv_w, tn=128)
    jax.block_until_ready(out_tiled)
    assert jnp.allclose(out_tiled, ref, atol=2e-3, rtol=2e-3), float(
        jnp.max(jnp.abs(out_tiled - ref))
    )

    print("KERNEL_OK")
</pallas_src>

<mosaic_0001>
module attributes {stable_mosaic.version = 11 : i64} {
  func.func @_bn_stats_kernel(%arg0: i32, %arg1: i32, %arg2: memref<1x128x400xf32, #tpu.memory_space<vmem>>, %arg3: memref<1x1x128x1xf32, #tpu.memory_space<vmem>>, %arg4: memref<1x1x128x1xf32, #tpu.memory_space<vmem>>) attributes {dimension_semantics = [#tpu.dimension_semantics<parallel>, #tpu.dimension_semantics<parallel>], iteration_bounds = array<i64: 2, 1>, scalar_prefetch = 0 : i64, scratch_operands = 0 : i64, tpu.core_type = #tpu.core_type<tc>, window_params = [{transform_indices = @transform_0, window_bounds = array<i64: 1, 128, 400>}, {transform_indices = @transform_1, window_bounds = array<i64: 1, 1, 128, 1>}, {transform_indices = @transform_2, window_bounds = array<i64: 1, 1, 128, 1>}]} {
    %0 = tpu.iota {dimensions = array<i32: 1>} : vector<1x400xi32>
    %c400_i32 = arith.constant 400 : i32
    %1 = arith.muli %arg1, %c400_i32 : i32
    %2 = vector.broadcast %1 : i32 to vector<1x400xi32>
    %3 = arith.addi %2, %0 : vector<1x400xi32>
    %c400_i32_0 = arith.constant 400 : i32
    %4 = vector.broadcast %c400_i32_0 : i32 to vector<1x400xi32>
    %5 = arith.cmpi slt, %3, %4 : vector<1x400xi32>
    %c0 = arith.constant 0 : index
    %c0_1 = arith.constant 0 : index
    %c0_2 = arith.constant 0 : index
    %6 = vector.load %arg2[%c0, %c0_1, %c0_2] : memref<1x128x400xf32, #tpu.memory_space<vmem>>, vector<1x128x400xf32>
    %7 = vector.shape_cast %6 : vector<1x128x400xf32> to vector<128x400xf32>
    %cst = arith.constant 0.000000e+00 : f32
    %8 = vector.shape_cast %5 : vector<1x400xi1> to vector<1x400xi1>
    %9 = vector.broadcast %8 : vector<1x400xi1> to vector<128x400xi1>
    %10 = vector.broadcast %cst : f32 to vector<128x400xf32>
    %11 = arith.select %9, %7, %10 : vector<128x400xi1>, vector<128x400xf32>
    %cst_3 = arith.constant dense<0.000000e+00> : vector<128xf32>
    %12 = vector.multi_reduction <add>, %11, %cst_3 [1] : vector<128x400xf32> to vector<128xf32>
    %13 = vector.shape_cast %12 : vector<128xf32> to vector<128x1xf32>
    %c0_4 = arith.constant 0 : index
    %c0_5 = arith.constant 0 : index
    %c0_6 = arith.constant 0 : index
    %c0_7 = arith.constant 0 : index
    %14 = vector.load %arg3[%c0_4, %c0_5, %c0_6, %c0_7] : memref<1x1x128x1xf32, #tpu.memory_space<vmem>>, vector<1x1x128x1xf32>
    %15 = vector.shape_cast %14 : vector<1x1x128x1xf32> to vector<128x1xf32>
    %16 = vector.shape_cast %13 : vector<128x1xf32> to vector<1x1x128x1xf32>
    tpu.vector_store %arg3[%c0_4, %c0_5, %c0_6, %c0_7], %16 {strides = array<i32>} : memref<1x1x128x1xf32, #tpu.memory_space<vmem>>, vector<1x1x128x1xf32>,
    %17 = arith.mulf %11, %11 : vector<128x400xf32>
    %cst_8 = arith.constant dense<0.000000e+00> : vector<128xf32>
    %18 = vector.multi_reduction <add>, %17, %cst_8 [1] : vector<128x400xf32> to vector<128xf32>
    %19 = vector.shape_cast %18 : vector<128xf32> to vector<128x1xf32>
    %c0_9 = arith.constant 0 : index
    %c0_10 = arith.constant 0 : index
    %c0_11 = arith.constant 0 : index
    %c0_12 = arith.constant 0 : index
    %20 = vector.load %arg4[%c0_9, %c0_10, %c0_11, %c0_12] : memref<1x1x128x1xf32, #tpu.memory_space<vmem>>, vector<1x1x128x1xf32>
    %21 = vector.shape_cast %20 : vector<1x1x128x1xf32> to vector<128x1xf32>
    %22 = vector.shape_cast %19 : vector<128x1xf32> to vector<1x1x128x1xf32>
    tpu.vector_store %arg4[%c0_9, %c0_10, %c0_11, %c0_12], %22 {strides = array<i32>} : memref<1x1x128x1xf32, #tpu.memory_space<vmem>>, vector<1x1x128x1xf32>,
    return
  }
  func.func @transform_0(%arg0: i32, %arg1: i32) -> (i32, i32, i32) {
    %c0_i32 = arith.constant 0 : i32
    %c0_i32_0 = arith.constant 0 : i32
    return %arg0, %c0_i32, %arg1 : i32, i32, i32
  }
  func.func @transform_1(%arg0: i32, %arg1: i32) -> (i32, i32, i32, i32) {
    %c0_i32 = arith.constant 0 : i32
    %c0_i32_0 = arith.constant 0 : i32
    %c0_i32_1 = arith.constant 0 : i32
    return %arg0, %arg1, %c0_i32, %c0_i32_0 : i32, i32, i32, i32
  }
  func.func @transform_2(%arg0: i32, %arg1: i32) -> (i32, i32, i32, i32) {
    %c0_i32 = arith.constant 0 : i32
    %c0_i32_0 = arith.constant 0 : i32
    %c0_i32_1 = arith.constant 0 : i32
    return %arg0, %arg1, %c0_i32, %c0_i32_0 : i32, i32, i32, i32
  }
}

module attributes {stable_mosaic.version = 11 : i64} {
  func.func @_fused_bn_add_relu_conv_kernel(%arg0: i32, %arg1: i32, %arg2: memref<1x128x400xf32, #tpu.memory_space<vmem>>, %arg3: memref<1x128x400xf32, #tpu.memory_space<vmem>>, %arg4: memref<128x1xf32, #tpu.memory_space<vmem>>, %arg5: memref<128x1xf32, #tpu.memory_space<vmem>>, %arg6: memref<256x128xf32, #tpu.memory_space<vmem>>, %arg7: memref<1x256x400xf32, #tpu.memory_space<vmem>>) attributes {dimension_semantics = [#tpu.dimension_semantics<parallel>, #tpu.dimension_semantics<parallel>], iteration_bounds = array<i64: 2, 1>, scalar_prefetch = 0 : i64, scratch_operands = 0 : i64, tpu.core_type = #tpu.core_type<tc>, window_params = [{transform_indices = @transform_0, window_bounds = array<i64: 1, 128, 400>}, {transform_indices = @transform_1, window_bounds = array<i64: 1, 128, 400>}, {pipeline_mode = #tpu.pipeline_mode<synchronous>, transform_indices = @transform_2, window_bounds = array<i64: 128, 1>}, {pipeline_mode = #tpu.pipeline_mode<synchronous>, transform_indices = @transform_3, window_bounds = array<i64: 128, 1>}, {pipeline_mode = #tpu.pipeline_mode<synchronous>, transform_indices = @transform_4, window_bounds = array<i64: 256, 128>}, {transform_indices = @transform_5, window_bounds = array<i64: 1, 256, 400>}]} {
    %c0 = arith.constant 0 : index
    %c0_0 = arith.constant 0 : index
    %c0_1 = arith.constant 0 : index
    %0 = vector.load %arg2[%c0, %c0_0, %c0_1] : memref<1x128x400xf32, #tpu.memory_space<vmem>>, vector<1x128x400xf32>
    %1 = vector.shape_cast %0 : vector<1x128x400xf32> to vector<128x400xf32>
    %c0_2 = arith.constant 0 : index
    %c0_3 = arith.constant 0 : index
    %2 = vector.load %arg4[%c0_2, %c0_3] : memref<128x1xf32, #tpu.memory_space<vmem>>, vector<128x1xf32>
    %3 = vector.broadcast %2 : vector<128x1xf32> to vector<128x400xf32>
    %4 = arith.mulf %1, %3 : vector<128x400xf32>
    %c0_4 = arith.constant 0 : index
    %c0_5 = arith.constant 0 : index
    %5 = vector.load %arg5[%c0_4, %c0_5] : memref<128x1xf32, #tpu.memory_space<vmem>>, vector<128x1xf32>
    %6 = vector.broadcast %5 : vector<128x1xf32> to vector<128x400xf32>
    %7 = arith.addf %4, %6 : vector<128x400xf32>
    %c0_6 = arith.constant 0 : index
    %c0_7 = arith.constant 0 : index
    %c0_8 = arith.constant 0 : index
    %8 = vector.load %arg3[%c0_6, %c0_7, %c0_8] : memref<1x128x400xf32, #tpu.memory_space<vmem>>, vector<1x128x400xf32>
    %9 = vector.shape_cast %8 : vector<1x128x400xf32> to vector<128x400xf32>
    %10 = arith.addf %7, %9 : vector<128x400xf32>
    %cst = arith.constant 0.000000e+00 : f32
    %11 = vector.broadcast %cst : f32 to vector<128x400xf32>
    %12 = arith.maximumf %10, %11 : vector<128x400xf32>
    %c0_9 = arith.constant 0 : index
    %c0_10 = arith.constant 0 : index
    %13 = vector.load %arg6[%c0_9, %c0_10] : memref<256x128xf32, #tpu.memory_space<vmem>>, vector<256x128xf32>
    %cst_11 = arith.constant dense<0.000000e+00> : vector<256x400xf32>
    %14 = tpu.matmul %13, %12, %cst_11 {dimension_numbers = #tpu.dot_dimension_numbers<[1], [0], [0], [1], [0, 0, 1, 1], [], []>} : vector<256x128xf32>, vector<128x400xf32>, vector<256x400xf32> -> vector<256x400xf32>
    %c0_12 = arith.constant 0 : index
    %c0_13 = arith.constant 0 : index
    %c0_14 = arith.constant 0 : index
    %15 = vector.load %arg7[%c0_12, %c0_13, %c0_14] : memref<1x256x400xf32, #tpu.memory_space<vmem>>, vector<1x256x400xf32>
    %16 = vector.shape_cast %15 : vector<1x256x400xf32> to vector<256x400xf32>
    %17 = vector.shape_cast %14 : vector<256x400xf32> to vector<1x256x400xf32>
    tpu.vector_store %arg7[%c0_12, %c0_13, %c0_14], %17 {strides = array<i32>} : memref<1x256x400xf32, #tpu.memory_space<vmem>>, vector<1x256x400xf32>,
    return
  }
  func.func @transform_0(%arg0: i32, %arg1: i32) -> (i32, i32, i32) {
    %c0_i32 = arith.constant 0 : i32
    %c0_i32_0 = arith.constant 0 : i32
    return %arg0, %c0_i32, %arg1 : i32, i32, i32
  }
  func.func @transform_1(%arg0: i32, %arg1: i32) -> (i32, i32, i32) {
    %c0_i32 = arith.constant 0 : i32
    %c0_i32_0 = arith.constant 0 : i32
    return %arg0, %c0_i32, %arg1 : i32, i32, i32
  }
  func.func @transform_2(%arg0: i32, %arg1: i32) -> (i32, i32) {
    %c0_i32 = arith.constant 0 : i32
    %c0_i32_0 = arith.constant 0 : i32
    %c0_i32_1 = arith.constant 0 : i32
    return %c0_i32, %c0_i32_0 : i32, i32
  }
  func.func @transform_3(%arg0: i32, %arg1: i32) -> (i32, i32) {
    %c0_i32 = arith.constant 0 : i32
    %c0_i32_0 = arith.constant 0 : i32
    %c0_i32_1 = arith.constant 0 : i32
    return %c0_i32, %c0_i32_0 : i32, i32
  }
  func.func @transform_4(%arg0: i32, %arg1: i32) -> (i32, i32) {
    %c0_i32 = arith.constant 0 : i32
    %c0_i32_0 = arith.constant 0 : i32
    %c0_i32_1 = arith.constant 0 : i32
    return %c0_i32, %c0_i32_0 : i32, i32
  }
  func.func @transform_5(%arg0: i32, %arg1: i32) -> (i32, i32, i32) {
    %c0_i32 = arith.constant 0 : i32
    %c0_i32_0 = arith.constant 0 : i32
    return %arg0, %c0_i32, %arg1 : i32, i32, i32
  }
}

</mosaic_0001>

<llo_original>
// kernel: module_forward.2
$region0: #{module_forward.2}
  #allocation0 [shape = 'u32[]', space=smem, size = 0x4, offset = 0x4, fixed_abs, tag = 'smem constant byte address 0x4 - core index']
  #allocation1 [shape = 'u32[144,128]{1,0:T(1,128)}', space=vmem, size = 0x12000, scoped, tag = 'internal scratch']
  %s0 = inlined_call_operand.vmem [shape: f32[2,128,400], index: 0, kind: input, shape index: {}]
  %s1 = inlined_call_operand.vmem [shape: f32[2,1,128,1], index: 1, kind: output, shape index: {0}]
  %s2 = inlined_call_operand.vmem [shape: f32[2,1,128,1], index: 2, kind: output, shape index: {1}]
  %3 = xla_tuple %s1, %s2
  %s4 = sld [smem:[#allocation0]]
  $region45: #{module_forward.2} parent=0
    _
  %s6 = ssub.s32 1, %s4
  %s7 = scalar_select 0, %s6, %s4
  loop: start=0, step=1, limit=4
  $region2: #{module_forward.2} parent=0 // loop_pre_header
    _
  $region3: #{module_forward.2} parent=0 // loop_header
    %s9 = sphi 0, %s13
    %p10 = scmp.ge.s32.totalorder %s9, 4
    %s16 = sphi 0, %s28
    %s17 = sphi 0, %s24
    %s18 = sphi 0, %s16
    %s19 = sphi 0, %s17
    %s20 = sphi 0, %s18
    %s21 = sphi 0, %s19
    %s33 = sphi 0, %s35
    %s36 = sphi 0, %s33
    %s37 = sphi 0, %s36
    %s53 = sphi 0, %s37
    %s61 = sphi 0, %s63
    %s64 = sphi 0, %s61
    %s65 = sphi 0, %s64
    %s81 = sphi 0, %s65
    %s89 = sphi 0, %s91
    %s92 = sphi 0, %s89
    %s93 = sphi 0, %s92
    %s109 = sphi 0, %s93
  $region4: #{module_forward.2} parent=0 // loop_header_branch
    %12 = sbr.rel (%p10) target = $region8
  $region5: #{module_forward.2} parent=0 // loop_body
    %s14 = ssub.s32 %s9, 1
    %s15 = ssub.s32 %s9, 2
    %s22 = sadd.s32 1, %s17
    %p23 = scmp.ge.s32.totalorder %s22, 1
    %s24 = scalar_select %p23, 0, %s22
    %s25 = sadd.s32 1, %s16
    %s26 = scalar_select %p23, %s25, %s16
    %p27 = scmp.ge.s32.totalorder %s26, 2
    %s28 = scalar_select %p27, 0, %s26
    %s29 = ssub.s32 %s16, %s28
    %s30 = ssub.s32 %s17, %s24
    %s31 = sor.u32 %s29, %s30
    %p32 = scmp.eq.s32.totalorder %s31, 0
    %s34 = sadd.s32 %s33, 1
    %s35 = scalar_select %p32, %s33, %s34
    %p38 = pneg %p32
    %p39 = scmp.eq.s32.totalorder %s9, 1
    %p40 = por %p38, %p39
    %p41 = scmp.ne.s32.totalorder %s33, %s36
    %p42 = scmp.eq.s32.totalorder %s9, 0
    %p43 = por %p41, %p42
    %p44 = scmp.ne.s32.totalorder %s33, %s36
    %p45 = scmp.eq.s32.totalorder %s14, 1
    %p46 = por %p44, %p45
    %p47 = scmp.ne.s32.totalorder %s36, %s37
    %p48 = scmp.eq.s32.totalorder %s14, 0
    %p49 = por %p47, %p48
    %p50 = scmp.ne.s32.totalorder %s36, %s37
    %p51 = scmp.eq.s32.totalorder %s15, 1
    %p52 = por %p50, %p51
    %p54 = scmp.ne.s32.totalorder %s37, %s53
    %p55 = scmp.eq.s32.totalorder %s15, 0
    %p56 = por %p54, %p55
    %s57 = ssub.s32 %s16, %s28
    %s58 = ssub.s32 %s17, %s24
    %s59 = sor.u32 %s57, %s58
    %p60 = scmp.eq.s32.totalorder %s59, 0
    %s62 = sadd.s32 %s61, 1
    %s63 = scalar_select %p60, %s61, %s62
    %p66 = pneg %p60
    %p67 = scmp.eq.s32.totalorder %s9, 1
    %p68 = por %p66, %p67
    %p69 = scmp.ne.s32.totalorder %s61, %s64
    %p70 = scmp.eq.s32.totalorder %s9, 0
    %p71 = por %p69, %p70
    %p72 = scmp.ne.s32.totalorder %s61, %s64
    %p73 = scmp.eq.s32.totalorder %s14, 1
    %p74 = por %p72, %p73
    %p75 = scmp.ne.s32.totalorder %s64, %s65
    %p76 = scmp.eq.s32.totalorder %s14, 0
    %p77 = por %p75, %p76
    %p78 = scmp.ne.s32.totalorder %s64, %s65
    %p79 = scmp.eq.s32.totalorder %s15, 1
    %p80 = por %p78, %p79
    %p82 = scmp.ne.s32.totalorder %s65, %s81
    %p83 = scmp.eq.s32.totalorder %s15, 0
    %p84 = por %p82, %p83
    %s85 = ssub.s32 %s16, %s28
    %s86 = ssub.s32 %s17, %s24
    %s87 = sor.u32 %s85, %s86
    %p88 = scmp.eq.s32.totalorder %s87, 0
    %s90 = sadd.s32 %s89, 1
    %s91 = scalar_select %p88, %s89, %s90
    %p94 = pneg %p88
    %p95 = scmp.eq.s32.totalorder %s9, 1
    %p96 = por %p94, %p95
    %p97 = scmp.ne.s32.totalorder %s89, %s92
    %p98 = scmp.eq.s32.totalorder %s9, 0
    %p99 = por %p97, %p98
    %p100 = scmp.ne.s32.totalorder %s89, %s92
    %p101 = scmp.eq.s32.totalorder %s14, 1
    %p102 = por %p100, %p101
    %p103 = scmp.ne.s32.totalorder %s92, %s93
    %p104 = scmp.eq.s32.totalorder %s14, 0
    %p105 = por %p103, %p104
    %p106 = scmp.ne.s32.totalorder %s92, %s93
    %p107 = scmp.eq.s32.totalorder %s15, 1
    %p108 = por %p106, %p107
    %p110 = scmp.ne.s32.totalorder %s93, %s109
    %p111 = scmp.eq.s32.totalorder %s15, 0
    %p112 = por %p110, %p111
    %p113 = scmp.le.s32.totalorder 1, %s9
    %p114 = scmp.lt.s32.totalorder %s9, 3
    %p115 = pnand %p113, %p114
    %p116 = pneg %p115
    // Predicated region
    $region9: #{module_forward.2} parent=5 // pred_check
      _
    $region10: #{module_forward.2} parent=5 // pred_check_branch
      %118 = sbr.rel (%p115) target = $region12
    $region11: #{module_forward.2} parent=5 // pred_region
      %s119 = ssub.s32 %s9, 1
    $region12: #{module_forward.2} parent=5 // pred_fallthru
      _
    %p120 = scmp.lt.s32.totalorder %s9, 2
    // Predicated region
    $region13: #{module_forward.2} parent=5 // pred_check
      %p121 = pneg %p120
    $region14: #{module_forward.2} parent=5 // pred_check_branch
      %123 = sbr.rel (%p121) target = $region16
    $region15: #{module_forward.2} parent=5 // pred_region
      // Predicated region
      $region17: #{module_forward.2} parent=15 // pred_check
        %p124 = pneg %p43
      $region18: #{module_forward.2} parent=15 // pred_check_branch
        %126 = sbr.rel (%p124) target = $region20
      $region19: #{module_forward.2} parent=15 // pred_region
        %s127 = smul.u32 4, %s17
        %p128 = scmp.lt.s32.totalorder %s16, 1
        %s129 = scalar_select %p128, %s16, 1
        %p130 = scmp.lt.s32.totalorder %s127, 3
        %s131 = scalar_select %p130, %s127, 3
        %s132 = smul.addr %s129, 64
        %s133 = sadd.s32 %s131, %s132
        %s134 = smul.addr %s133, 8
        %s135 = scalar_lea.vmem %s0, %s134
        %s136 = smul.u32 4, %s17
      $region20: #{module_forward.2} parent=15 // pred_fallthru
        _
    $region16: #{module_forward.2} parent=5 // pred_fallthru
      _
    %p137 = scmp.le.s32.totalorder 1, %s9
    %p138 = scmp.lt.s32.totalorder %s9, 3
    %p139 = pnand %p137, %p138
    %p140 = pneg %p139
    // Predicated region
    $region21: #{module_forward.2} parent=5 // pred_check
      _
    $region22: #{module_forward.2} parent=5 // pred_check_branch
      %142 = sbr.rel (%p139) target = $region24
    $region23: #{module_forward.2} parent=5 // pred_region
      %s143 = ssub.s32 %s9, 1
      %s144 = smul.u32 4, %s19
      %p145 = scmp.lt.s32.totalorder %s18, 1
      %s146 = scalar_select %p145, %s18, 1
      %p147 = scmp.lt.s32.totalorder %s144, 3
      %s148 = scalar_select %p147, %s144, 3
      %s149 = smul.addr %s146, 64
      %s150 = sadd.s32 %s148, %s149
      %s151 = smul.addr %s150, 8
      %s152 = scalar_lea.vmem %s0, %s151
      %p153 = pneg %p49
      %p154 = pneg %p46
      %p155 = pneg %p77
      %p156 = pneg %p74
      %p157 = scmp.lt.s32.totalorder %s18, 1
      %s158 = scalar_select %p157, %s18, 1
      %p159 = scmp.lt.s32.totalorder %s19, 0
      %s160 = scalar_select %p159, %s19, 0
      %s161 = smul.addr %s160, 16
      %s162 = smul.addr %s158, 16
      %s163 = sadd.s32 %s161, %s162
      %s164 = smul.addr %s163, 8
      %s165 = scalar_lea.vmem %s1, %s164
      %p166 = pneg %p105
      %p167 = pneg %p102
      %p168 = scmp.lt.s32.totalorder %s18, 1
      %s169 = scalar_select %p168, %s18, 1
      %p170 = scmp.lt.s32.totalorder %s19, 0
      %s171 = scalar_select %p170, %s19, 0
      %s172 = smul.addr %s171, 16
      %s173 = smul.addr %s169, 16
      %s174 = sadd.s32 %s172, %s173
      %s175 = smul.addr %s174, 8
      %s176 = scalar_lea.vmem %s2, %s175
      %s177 = smul.u32 4, %s19
      %p178 = scmp.lt.s32.totalorder %s18, 1
      %s179 = scalar_select %p178, %s18, 1
      %p180 = scmp.lt.s32.totalorder %s177, 3
      %s181 = scalar_select %p180, %s177, 3
      %s182 = smul.addr %s179, 64
      %s183 = sadd.s32 %s181, %s182
      %s184 = smul.addr %s183, 8
      %s185 = scalar_lea.vmem %s0, %s184
      %s186 = smul.u32 4, %s19
      %p187 = scmp.lt.s32.totalorder %s18, 1
      %s188 = scalar_select %p187, %s18, 1
      %p189 = scmp.lt.s32.totalorder %s19, 0
      %s190 = scalar_select %p189, %s19, 0
      %s191 = smul.addr %s190, 16
      %s192 = smul.addr %s188, 16
      %s193 = sadd.s32 %s191, %s192
      %s194 = smul.addr %s193, 8
      %s195 = scalar_lea.vmem %s1, %s194
      %p196 = scmp.lt.s32.totalorder %s18, 1
      %s197 = scalar_select %p196, %s18, 1
      %p198 = scmp.lt.s32.totalorder %s19, 0
      %s199 = scalar_select %p198, %s19, 0
      %s200 = smul.addr %s199, 16
      %s201 = smul.addr %s197, 16
      %s202 = sadd.s32 %s200, %s201
      %s203 = smul.addr %s202, 8
      %s204 = scalar_lea.vmem %s2, %s203
      %v205 = vlaneseq
      %v206 = vand.u32 %v205, 127
      %v207 = vadd.s32 %v206, 128
      %v208 = vadd.s32 %v206, 256
      %v209 = vadd.s32 %v206, 384
      %s210 = smul.u32 %s19, 400
      %v211 = vstv %s210
      %v212 = vadd.s32 %v211, %v206
      %v213 = vadd.s32 %v211, %v207
      %v214 = vadd.s32 %v211, %v208
      %v215 = vadd.s32 %v211, %v209
      %vm216 = vcmp.lt.s32.totalorder %v212, 400
      %vm217 = vcmp.lt.s32.totalorder %v213, 400
      %vm218 = vcmp.lt.s32.totalorder %v214, 400
      %vm219 = vcmp.lt.s32.totalorder %v215, 400
      %v220 = vld [vmem:[%s185] sm:$0xff]
      %v221 = vld [vmem:[%s185 + $0x8] sm:$0xff]
      %v222 = vld [vmem:[%s185 + $0x10] sm:$0xff]
      %v223 = vld [vmem:[%s185 + $0x18] sm:$0xff]
      %v224 = vld [vmem:[%s185 + $0x20] sm:$0xff]
      %v225 = vld [vmem:[%s185 + $0x28] sm:$0xff]
      %v226 = vld [vmem:[%s185 + $0x30] sm:$0xff]
      %v227 = vld [vmem:[%s185 + $0x38] sm:$0xff]
      %v228 = vld [vmem:[%s185 + $0x40] sm:$0xff]
      %v229 = vld [vmem:[%s185 + $0x48] sm:$0xff]
      %v230 = vld [vmem:[%s185 + $0x50] sm:$0xff]
      %v231 = vld [vmem:[%s185 + $0x58] sm:$0xff]
      %v232 = vld [vmem:[%s185 + $0x60] sm:$0xff]
      %v233 = vld [vmem:[%s185 + $0x68] sm:$0xff]
      %v234 = vld [vmem:[%s185 + $0x70] sm:$0xff]
      %v235 = vld [vmem:[%s185 + $0x78] sm:$0xff]
      %v236 = vld [vmem:[%s185 + $0x80] sm:$0xff]
      %v237 = vld [vmem:[%s185 + $0x88] sm:$0xff]
      %v238 = vld [vmem:[%s185 + $0x90] sm:$0xff]
      %v239 = vld [vmem:[%s185 + $0x98] sm:$0xff]
      %v240 = vld [vmem:[%s185 + $0xa0] sm:$0xff]
      %v241 = vld [vmem:[%s185 + $0xa8] sm:$0xff]
      %v242 = vld [vmem:[%s185 + $0xb0] sm:$0xff]
      %v243 = vld [vmem:[%s185 + $0xb8] sm:$0xff]
      %v244 = vld [vmem:[%s185 + $0xc0] sm:$0xff]
      %v245 = vld [vmem:[%s185 + $0xc8] sm:$0xff]
      %v246 = vld [vmem:[%s185 + $0xd0] sm:$0xff]
      %v247 = vld [vmem:[%s185 + $0xd8] sm:$0xff]
      %v248 = vld [vmem:[%s185 + $0xe0] sm:$0xff]
      %v249 = vld [vmem:[%s185 + $0xe8] sm:$0xff]
      %v250 = vld [vmem:[%s185 + $0xf0] sm:$0xff]
      %v251 = vld [vmem:[%s185 + $0xf8] sm:$0xff]
      %v252 = vld [vmem:[%s185 + $0x100] sm:$0xff]
      %v253 = vld [vmem:[%s185 + $0x108] sm:$0xff]
      %v254 = vld [vmem:[%s185 + $0x110] sm:$0xff]
      %v255 = vld [vmem:[%s185 + $0x118] sm:$0xff]
      %v256 = vld [vmem:[%s185 + $0x120] sm:$0xff]
      %v257 = vld [vmem:[%s185 + $0x128] sm:$0xff]
      %v258 = vld [vmem:[%s185 + $0x130] sm:$0xff]
      %v259 = vld [vmem:[%s185 + $0x138] sm:$0xff]
      %v260 = vld [vmem:[%s185 + $0x140] sm:$0xff]
      %v261 = vld [vmem:[%s185 + $0x148] sm:$0xff]
      %v262 = vld [vmem:[%s185 + $0x150] sm:$0xff]
      %v263 = vld [vmem:[%s185 + $0x158] sm:$0xff]
      %v264 = vld [vmem:[%s185 + $0x160] sm:$0xff]
      %v265 = vld [vmem:[%s185 + $0x168] sm:$0xff]
      %v266 = vld [vmem:[%s185 + $0x170] sm:$0xff]
      %v267 = vld [vmem:[%s185 + $0x178] sm:$0xff]
      %v268 = vld [vmem:[%s185 + $0x180] sm:$0xff]
      %v269 = vld [vmem:[%s185 + $0x188] sm:$0xff]
      %v270 = vld [vmem:[%s185 + $0x190] sm:$0xff]
      %v271 = vld [vmem:[%s185 + $0x198] sm:$0xff]
      %v272 = vld [vmem:[%s185 + $0x1a0] sm:$0xff]
      %v273 = vld [vmem:[%s185 + $0x1a8] sm:$0xff]
      %v274 = vld [vmem:[%s185 + $0x1b0] sm:$0xff]
      %v275 = vld [vmem:[%s185 + $0x1b8] sm:$0xff]
      %v276 = vld [vmem:[%s185 + $0x1c0] sm:$0xff]
      %v277 = vld [vmem:[%s185 + $0x1c8] sm:$0xff]
      %v278 = vld [vmem:[%s185 + $0x1d0] sm:$0xff]
      %v279 = vld [vmem:[%s185 + $0x1d8] sm:$0xff]
      %v280 = vld [vmem:[%s185 + $0x1e0] sm:$0xff]
      %v281 = vld [vmem:[%s185 + $0x1e8] sm:$0xff]
      %v282 = vld [vmem:[%s185 + $0x1f0] sm:$0xff]
      %v283 = vld [vmem:[%s185 + $0x1f8] sm:$0xff]
      %v284 = vsel %vm216, 1, 0
      %v285 = vsel %vm217, 1, 0
      %v286 = vsel %vm218, 1, 0
      %v287 = vsel %vm219, 1, 0
      %vm288 = vcmp.eq.s32.totalorder %v284, 1
      %vm289 = vcmp.eq.s32.totalorder %v285, 1
      %vm290 = vcmp.eq.s32.totalorder %v286, 1
      %vm291 = vcmp.eq.s32.totalorder %v287, 1
      %v292 = vsel %vm288, %v220, 0.0
      %v293 = vsel %vm289, %v221, 0.0
      %v294 = vsel %vm290, %v222, 0.0
      %v295 = vsel %vm291, %v223, 0.0
      %v296 = vsel %vm288, %v224, 0.0
      %v297 = vsel %vm289, %v225, 0.0
      %v298 = vsel %vm290, %v226, 0.0
      %v299 = vsel %vm291, %v227, 0.0
      %v300 = vsel %vm288, %v228, 0.0
      %v301 = vsel %vm289, %v229, 0.0
      %v302 = vsel %vm290, %v230, 0.0
      %v303 = vsel %vm291, %v231, 0.0
      %v304 = vsel %vm288, %v232, 0.0
      %v305 = vsel %vm289, %v233, 0.0
      %v306 = vsel %vm290, %v234, 0.0
      %v307 = vsel %vm291, %v235, 0.0
      %v308 = vsel %vm288, %v236, 0.0
      %v309 = vsel %vm289, %v237, 0.0
      %v310 = vsel %vm290, %v238, 0.0
      %v311 = vsel %vm291, %v239, 0.0
      %v312 = vsel %vm288, %v240, 0.0
      %v313 = vsel %vm289, %v241, 0.0
      %v314 = vsel %vm290, %v242, 0.0
      %v315 = vsel %vm291, %v243, 0.0
      %v316 = vsel %vm288, %v244, 0.0
      %v317 = vsel %vm289, %v245, 0.0
      %v318 = vsel %vm290, %v246, 0.0
      %v319 = vsel %vm291, %v247, 0.0
      %v320 = vsel %vm288, %v248, 0.0
      %v321 = vsel %vm289, %v249, 0.0
      %v322 = vsel %vm290, %v250, 0.0
      %v323 = vsel %vm291, %v251, 0.0
      %v324 = vsel %vm288, %v252, 0.0
      %v325 = vsel %vm289, %v253, 0.0
      %v326 = vsel %vm290, %v254, 0.0
      %v327 = vsel %vm291, %v255, 0.0
      %v328 = vsel %vm288, %v256, 0.0
      %v329 = vsel %vm289, %v257, 0.0
      %v330 = vsel %vm290, %v258, 0.0
      %v331 = vsel %vm291, %v259, 0.0
      %v332 = vsel %vm288, %v260, 0.0
      %v333 = vsel %vm289, %v261, 0.0
      %v334 = vsel %vm290, %v262, 0.0
      %v335 = vsel %vm291, %v263, 0.0
      %v336 = vsel %vm288, %v264, 0.0
      %v337 = vsel %vm289, %v265, 0.0
      %v338 = vsel %vm290, %v266, 0.0
      %v339 = vsel %vm291, %v267, 0.0
      %v340 = vsel %vm288, %v268, 0.0
      %v341 = vsel %vm289, %v269, 0.0
      %v342 = vsel %vm290, %v270, 0.0
      %v343 = vsel %vm291, %v271, 0.0
      %v344 = vsel %vm288, %v272, 0.0
      %v345 = vsel %vm289, %v273, 0.0
      %v346 = vsel %vm290, %v274, 0.0
      %v347 = vsel %vm291, %v275, 0.0
      %v348 = vsel %vm288, %v276, 0.0
      %v349 = vsel %vm289, %v277, 0.0
      %v350 = vsel %vm290, %v278, 0.0
      %v351 = vsel %vm291, %v279, 0.0
      %v352 = vsel %vm288, %v280, 0.0
      %v353 = vsel %vm289, %v281, 0.0
      %v354 = vsel %vm290, %v282, 0.0
      %v355 = vsel %vm291, %v283, 0.0
      %v356 = vadd.f32 %v292, %v293
      %v357 = vadd.f32 %v356, %v294
      %vm358 = vcmask 130048
      %v359 = vsel %vm358, %v295, 0.0
      %v360 = vadd.f32 %v357, %v359
      %361 = vadd.xlane.f32.xlu0 %v360
      %v362 = vpop.xlane.xlu0 %361
      %v363 = vadd.f32 %v296, %v297
      %v364 = vadd.f32 %v363, %v298
      %v365 = vsel %vm358, %v299, 0.0
      %v366 = vadd.f32 %v364, %v365
      %367 = vadd.xlane.f32.xlu0 %v366
      %v368 = vpop.xlane.xlu0 %367
      %v369 = vadd.f32 %v300, %v301
      %v370 = vadd.f32 %v369, %v302
      %v371 = vsel %vm358, %v303, 0.0
      %v372 = vadd.f32 %v370, %v371
      %373 = vadd.xlane.f32.xlu0 %v372
      %v374 = vpop.xlane.xlu0 %373
      %v375 = vadd.f32 %v304, %v305
      %v376 = vadd.f32 %v375, %v306
      %v377 = vsel %vm358, %v307, 0.0
      %v378 = vadd.f32 %v376, %v377
      %379 = vadd.xlane.f32.xlu0 %v378
      %v380 = vpop.xlane.xlu0 %379
      %v381 = vadd.f32 %v308, %v309
      %v382 = vadd.f32 %v381, %v310
      %v383 = vsel %vm358, %v311, 0.0
      %v384 = vadd.f32 %v382, %v383
      %385 = vadd.xlane.f32.xlu0 %v384
      %v386 = vpop.xlane.xlu0 %385
      %v387 = vadd.f32 %v312, %v313
      %v388 = vadd.f32 %v387, %v314
      %v389 = vsel %vm358, %v315, 0.0
      %v390 = vadd.f32 %v388, %v389
      %391 = vadd.xlane.f32.xlu0 %v390
      %v392 = vpop.xlane.xlu0 %391
      %v393 = vadd.f32 %v316, %v317
      %v394 = vadd.f32 %v393, %v318
      %v395 = vsel %vm358, %v319, 0.0
      %v396 = vadd.f32 %v394, %v395
      %397 = vadd.xlane.f32.xlu0 %v396
      %v398 = vpop.xlane.xlu0 %397
      %v399 = vadd.f32 %v320, %v321
      %v400 = vadd.f32 %v399, %v322
      %v401 = vsel %vm358, %v323, 0.0
      %v402 = vadd.f32 %v400, %v401
      %403 = vadd.xlane.f32.xlu0 %v402
      %v404 = vpop.xlane.xlu0 %403
      %v405 = vadd.f32 %v324, %v325
      %v406 = vadd.f32 %v405, %v326
      %v407 = vsel %vm358, %v327, 0.0
      %v408 = vadd.f32 %v406, %v407
      %409 = vadd.xlane.f32.xlu0 %v408
      %v410 = vpop.xlane.xlu0 %409
      %v411 = vadd.f32 %v328, %v329
      %v412 = vadd.f32 %v411, %v330
      %v413 = vsel %vm358, %v331, 0.0
      %v414 = vadd.f32 %v412, %v413
      %415 = vadd.xlane.f32.xlu0 %v414
      %v416 = vpop.xlane.xlu0 %415
      %v417 = vadd.f32 %v332, %v333
      %v418 = vadd.f32 %v417, %v334
      %v419 = vsel %vm358, %v335, 0.0
      %v420 = vadd.f32 %v418, %v419
      %421 = vadd.xlane.f32.xlu0 %v420
      %v422 = vpop.xlane.xlu0 %421
      %v423 = vadd.f32 %v336, %v337
      %v424 = vadd.f32 %v423, %v338
      %v425 = vsel %vm358, %v339, 0.0
      %v426 = vadd.f32 %v424, %v425
      %427 = vadd.xlane.f32.xlu0 %v426
      %v428 = vpop.xlane.xlu0 %427
      %v429 = vadd.f32 %v340, %v341
      %v430 = vadd.f32 %v429, %v342
      %v431 = vsel %vm358, %v343, 0.0
      %v432 = vadd.f32 %v430, %v431
      %433 = vadd.xlane.f32.xlu0 %v432
      %v434 = vpop.xlane.xlu0 %433
      %v435 = vadd.f32 %v344, %v345
      %v436 = vadd.f32 %v435, %v346
      %v437 = vsel %vm358, %v347, 0.0
      %v438 = vadd.f32 %v436, %v437
      %439 = vadd.xlane.f32.xlu0 %v438
      %v440 = vpop.xlane.xlu0 %439
      %v441 = vadd.f32 %v348, %v349
      %v442 = vadd.f32 %v441, %v350
      %v443 = vsel %vm358, %v351, 0.0
      %v444 = vadd.f32 %v442, %v443
      %445 = vadd.xlane.f32.xlu0 %v444
      %v446 = vpop.xlane.xlu0 %445
      %v447 = vadd.f32 %v352, %v353
      %v448 = vadd.f32 %v447, %v354
      %v449 = vsel %vm358, %v355, 0.0
      %v450 = vadd.f32 %v448, %v449
      %451 = vadd.xlane.f32.xlu0 %v450
      %v452 = vpop.xlane.xlu0 %451
      %vm453 = vcmask 7168
      %454 = vst.msk [vmem:[%s195] sm:$0xff] %vm453, %v362
      %455 = vst.msk [vmem:[%s195 + $0x8] sm:$0xff] %vm453, %v368
      %456 = vst.msk [vmem:[%s195 + $0x10] sm:$0xff] %vm453, %v374
      %457 = vst.msk [vmem:[%s195 + $0x18] sm:$0xff] %vm453, %v380
      %458 = vst.msk [vmem:[%s195 + $0x20] sm:$0xff] %vm453, %v386
      %459 = vst.msk [vmem:[%s195 + $0x28] sm:$0xff] %vm453, %v392
      %460 = vst.msk [vmem:[%s195 + $0x30] sm:$0xff] %vm453, %v398
      %461 = vst.msk [vmem:[%s195 + $0x38] sm:$0xff] %vm453, %v404
      %462 = vst.msk [vmem:[%s195 + $0x40] sm:$0xff] %vm453, %v410
      %463 = vst.msk [vmem:[%s195 + $0x48] sm:$0xff] %vm453, %v416
      %464 = vst.msk [vmem:[%s195 + $0x50] sm:$0xff] %vm453, %v422
      %465 = vst.msk [vmem:[%s195 + $0x58] sm:$0xff] %vm453, %v428
      %466 = vst.msk [vmem:[%s195 + $0x60] sm:$0xff] %vm453, %v434
      %467 = vst.msk [vmem:[%s195 + $0x68] sm:$0xff] %vm453, %v440
      %468 = vst.msk [vmem:[%s195 + $0x70] sm:$0xff] %vm453, %v446
      %469 = vst.msk [vmem:[%s195 + $0x78] sm:$0xff] %vm453, %v452
      %v470 = vmul.f32 %v292, %v292
      %v471 = vmul.f32 %v293, %v293
      %v472 = vmul.f32 %v294, %v294
      %v473 = vmul.f32 %v295, %v295
      %v474 = vmul.f32 %v296, %v296
      %v475 = vmul.f32 %v297, %v297
      %v476 = vmul.f32 %v298, %v298
      %v477 = vmul.f32 %v299, %v299
      %v478 = vmul.f32 %v300, %v300
      %v479 = vmul.f32 %v301, %v301
      %v480 = vmul.f32 %v302, %v302
      %v481 = vmul.f32 %v303, %v303
      %v482 = vmul.f32 %v304, %v304
      %v483 = vmul.f32 %v305, %v305
      %v484 = vmul.f32 %v306, %v306
      %v485 = vmul.f32 %v307, %v307
      %v486 = vmul.f32 %v308, %v308
      %v487 = vmul.f32 %v309, %v309
      %v488 = vmul.f32 %v310, %v310
      %v489 = vmul.f32 %v311, %v311
      %v490 = vmul.f32 %v312, %v312
      %v491 = vmul.f32 %v313, %v313
      %v492 = vmul.f32 %v314, %v314
      %v493 = vmul.f32 %v315, %v315
      %v494 = vmul.f32 %v316, %v316
      %v495 = vmul.f32 %v317, %v317
      %v496 = vmul.f32 %v318, %v318
      %v497 = vmul.f32 %v319, %v319
      %v498 = vmul.f32 %v320, %v320
      %v499 = vmul.f32 %v321, %v321
      %v500 = vmul.f32 %v322, %v322
      %v501 = vmul.f32 %v323, %v323
      %v502 = vmul.f32 %v324, %v324
      %v503 = vmul.f32 %v325, %v325
      %v504 = vmul.f32 %v326, %v326
      %v505 = vmul.f32 %v327, %v327
      %v506 = vmul.f32 %v328, %v328
      %v507 = vmul.f32 %v329, %v329
      %v508 = vmul.f32 %v330, %v330
      %v509 = vmul.f32 %v331, %v331
      %v510 = vmul.f32 %v332, %v332
      %v511 = vmul.f32 %v333, %v333
      %v512 = vmul.f32 %v334, %v334
      %v513 = vmul.f32 %v335, %v335
      %v514 = vmul.f32 %v336, %v336
      %v515 = vmul.f32 %v337, %v337
      %v516 = vmul.f32 %v338, %v338
      %v517 = vmul.f32 %v339, %v339
      %v518 = vmul.f32 %v340, %v340
      %v519 = vmul.f32 %v341, %v341
      %v520 = vmul.f32 %v342, %v342
      %v521 = vmul.f32 %v343, %v343
      %v522 = vmul.f32 %v344, %v344
      %v523 = vmul.f32 %v345, %v345
      %v524 = vmul.f32 %v346, %v346
      %v525 = vmul.f32 %v347, %v347
      %v526 = vmul.f32 %v348, %v348
      %v527 = vmul.f32 %v349, %v349
      %v528 = vmul.f32 %v350, %v350
      %v529 = vmul.f32 %v351, %v351
      %v530 = vmul.f32 %v352, %v352
      %v531 = vmul.f32 %v353, %v353
      %v532 = vmul.f32 %v354, %v354
      %v533 = vmul.f32 %v355, %v355
      %v534 = vadd.f32 %v470, %v471
      %v535 = vadd.f32 %v534, %v472
      %v536 = vsel %vm358, %v473, 0.0
      %v537 = vadd.f32 %v535, %v536
      %538 = vadd.xlane.f32.xlu0 %v537
      %v539 = vpop.xlane.xlu0 %538
      %v540 = vadd.f32 %v474, %v475
      %v541 = vadd.f32 %v540, %v476
      %v542 = vsel %vm358, %v477, 0.0
      %v543 = vadd.f32 %v541, %v542
      %544 = vadd.xlane.f32.xlu0 %v543
      %v545 = vpop.xlane.xlu0 %544
      %v546 = vadd.f32 %v478, %v479
      %v547 = vadd.f32 %v546, %v480
      %v548 = vsel %vm358, %v481, 0.0
      %v549 = vadd.f32 %v547, %v548
      %550 = vadd.xlane.f32.xlu0 %v549
      %v551 = vpop.xlane.xlu0 %550
      %v552 = vadd.f32 %v482, %v483
      %v553 = vadd.f32 %v552, %v484
      %v554 = vsel %vm358, %v485, 0.0
      %v555 = vadd.f32 %v553, %v554
      %556 = vadd.xlane.f32.xlu0 %v555
      %v557 = vpop.xlane.xlu0 %556
      %v558 = vadd.f32 %v486, %v487
      %v559 = vadd.f32 %v558, %v488
      %v560 = vsel %vm358, %v489, 0.0
      %v561 = vadd.f32 %v559, %v560
      %562 = vadd.xlane.f32.xlu0 %v561
      %v563 = vpop.xlane.xlu0 %562
      %v564 = vadd.f32 %v490, %v491
      %v565 = vadd.f32 %v564, %v492
      %v566 = vsel %vm358, %v493, 0.0
      %v567 = vadd.f32 %v565, %v566
      %568 = vadd.xlane.f32.xlu0 %v567
      %v569 = vpop.xlane.xlu0 %568
      %v570 = vadd.f32 %v494, %v495
      %v571 = vadd.f32 %v570, %v496
      %v572 = vsel %vm358, %v497, 0.0
      %v573 = vadd.f32 %v571, %v572
      %574 = vadd.xlane.f32.xlu0 %v573
      %v575 = vpop.xlane.xlu0 %574
      %v576 = vadd.f32 %v498, %v499
      %v577 = vadd.f32 %v576, %v500
      %v578 = vsel %vm358, %v501, 0.0
      %v579 = vadd.f32 %v577, %v578
      %580 = vadd.xlane.f32.xlu0 %v579
      %v581 = vpop.xlane.xlu0 %580
      %v582 = vadd.f32 %v502, %v503
      %v583 = vadd.f32 %v582, %v504
      %v584 = vsel %vm358, %v505, 0.0
      %v585 = vadd.f32 %v583, %v584
      %586 = vadd.xlane.f32.xlu0 %v585
      %v587 = vpop.xlane.xlu0 %586
      %v588 = vadd.f32 %v506, %v507
      %v589 = vadd.f32 %v588, %v508
      %v590 = vsel %vm358, %v509, 0.0
      %v591 = vadd.f32 %v589, %v590
      %592 = vadd.xlane.f32.xlu0 %v591
      %v593 = vpop.xlane.xlu0 %592
      %v594 = vadd.f32 %v510, %v511
      %v595 = vadd.f32 %v594, %v512
      %v596 = vsel %vm358, %v513, 0.0
      %v597 = vadd.f32 %v595, %v596
      %598 = vadd.xlane.f32.xlu0 %v597
      %v599 = vpop.xlane.xlu0 %598
      %v600 = vadd.f32 %v514, %v515
      %v601 = vadd.f32 %v600, %v516
      %v602 = vsel %vm358, %v517, 0.0
      %v603 = vadd.f32 %v601, %v602
      %604 = vadd.xlane.f32.xlu0 %v603
      %v605 = vpop.xlane.xlu0 %604
      %v606 = vadd.f32 %v518, %v519
      %v607 = vadd.f32 %v606, %v520
      %v608 = vsel %vm358, %v521, 0.0
      %v609 = vadd.f32 %v607, %v608
      %610 = vadd.xlane.f32.xlu0 %v609
      %v611 = vpop.xlane.xlu0 %610
      %v612 = vadd.f32 %v522, %v523
      %v613 = vadd.f32 %v612, %v524
      %v614 = vsel %vm358, %v525, 0.0
      %v615 = vadd.f32 %v613, %v614
      %616 = vadd.xlane.f32.xlu0 %v615
      %v617 = vpop.xlane.xlu0 %616
      %v618 = vadd.f32 %v526, %v527
      %v619 = vadd.f32 %v618, %v528
      %v620 = vsel %vm358, %v529, 0.0
      %v621 = vadd.f32 %v619, %v620
      %622 = vadd.xlane.f32.xlu0 %v621
      %v623 = vpop.xlane.xlu0 %622
      %v624 = vadd.f32 %v530, %v531
      %v625 = vadd.f32 %v624, %v532
      %v626 = vsel %vm358, %v533, 0.0
      %v627 = vadd.f32 %v625, %v626
      %628 = vadd.xlane.f32.xlu0 %v627
      %v629 = vpop.xlane.xlu0 %628
      %630 = vst.msk [vmem:[%s204] sm:$0xff] %vm453, %v539
      %631 = vst.msk [vmem:[%s204 + $0x8] sm:$0xff] %vm453, %v545
      %632 = vst.msk [vmem:[%s204 + $0x10] sm:$0xff] %vm453, %v551
      %633 = vst.msk [vmem:[%s204 + $0x18] sm:$0xff] %vm453, %v557
      %634 = vst.msk [vmem:[%s204 + $0x20] sm:$0xff] %vm453, %v563
      %635 = vst.msk [vmem:[%s204 + $0x28] sm:$0xff] %vm453, %v569
      %636 = vst.msk [vmem:[%s204 + $0x30] sm:$0xff] %vm453, %v575
      %637 = vst.msk [vmem:[%s204 + $0x38] sm:$0xff] %vm453, %v581
      %638 = vst.msk [vmem:[%s204 + $0x40] sm:$0xff] %vm453, %v587
      %639 = vst.msk [vmem:[%s204 + $0x48] sm:$0xff] %vm453, %v593
      %640 = vst.msk [vmem:[%s204 + $0x50] sm:$0xff] %vm453, %v599
      %641 = vst.msk [vmem:[%s204 + $0x58] sm:$0xff] %vm453, %v605
      %642 = vst.msk [vmem:[%s204 + $0x60] sm:$0xff] %vm453, %v611
      %643 = vst.msk [vmem:[%s204 + $0x68] sm:$0xff] %vm453, %v617
      %644 = vst.msk [vmem:[%s204 + $0x70] sm:$0xff] %vm453, %v623
      %645 = vst.msk [vmem:[%s204 + $0x78] sm:$0xff] %vm453, %v629
      %p646 = scmp.lt.s32.totalorder %s18, 1
      %s647 = scalar_select %p646, %s18, 1
      %p648 = scmp.lt.s32.totalorder %s19, 0
      %s649 = scalar_select %p648, %s19, 0
      %s650 = smul.addr %s649, 16
      %s651 = smul.addr %s647, 16
      %s652 = sadd.s32 %s650, %s651
      %s653 = smul.addr %s652, 8
      %s654 = scalar_lea.vmem %s1, %s653
      %p655 = scmp.lt.s32.totalorder %s18, 1
      %s656 = scalar_select %p655, %s18, 1
      %p657 = scmp.lt.s32.totalorder %s19, 0
      %s658 = scalar_select %p657, %s19, 0
      %s659 = smul.addr %s658, 16
      %s660 = smul.addr %s656, 16
      %s661 = sadd.s32 %s659, %s660
      %s662 = smul.addr %s661, 8
      %s663 = scalar_lea.vmem %s2, %s662
      // Predicated region
      $region25: #{module_forward.2} parent=23 // pred_check
        %p664 = pneg %p74
      $region26: #{module_forward.2} parent=23 // pred_check_branch
        %666 = sbr.rel (%p664) target = $region28
      $region27: #{module_forward.2} parent=23 // pred_region
        _
      $region28: #{module_forward.2} parent=23 // pred_fallthru
        _
      // Predicated region
      $region29: #{module_forward.2} parent=23 // pred_check
        %p667 = pneg %p102
      $region30: #{module_forward.2} parent=23 // pred_check_branch
        %669 = sbr.rel (%p667) target = $region32
      $region31: #{module_forward.2} parent=23 // pred_region
        _
      $region32: #{module_forward.2} parent=23 // pred_fallthru
        _
    $region24: #{module_forward.2} parent=5 // pred_fallthru
      _
    %p670 = scmp.le.s32.totalorder 2, %s9
    // Predicated region
    $region33: #{module_forward.2} parent=5 // pred_check
      %p671 = pneg %p670
    $region34: #{module_forward.2} parent=5 // pred_check_branch
      %673 = sbr.rel (%p671) target = $region36
    $region35: #{module_forward.2} parent=5 // pred_region
      %s674 = ssub.s32 %s9, 2
      // Predicated region
      $region37: #{module_forward.2} parent=35 // pred_check
        %p675 = pneg %p80
      $region38: #{module_forward.2} parent=35 // pred_check_branch
        %677 = sbr.rel (%p675) target = $region40
      $region39: #{module_forward.2} parent=35 // pred_region
        %p678 = scmp.lt.s32.totalorder %s20, 1
        %s679 = scalar_select %p678, %s20, 1
        %p680 = scmp.lt.s32.totalorder %s21, 0
        %s681 = scalar_select %p680, %s21, 0
        %s682 = smul.addr %s681, 16
        %s683 = smul.addr %s679, 16
        %s684 = sadd.s32 %s682, %s683
        %s685 = smul.addr %s684, 8
        %s686 = scalar_lea.vmem %s1, %s685
      $region40: #{module_forward.2} parent=35 // pred_fallthru
        _
      // Predicated region
      $region41: #{module_forward.2} parent=35 // pred_check
        %p687 = pneg %p108
      $region42: #{module_forward.2} parent=35 // pred_check_branch
        %689 = sbr.rel (%p687) target = $region44
      $region43: #{module_forward.2} parent=35 // pred_region
        %p690 = scmp.lt.s32.totalorder %s20, 1
        %s691 = scalar_select %p690, %s20, 1
        %p692 = scmp.lt.s32.totalorder %s21, 0
        %s693 = scalar_select %p692, %s21, 0
        %s694 = smul.addr %s693, 16
        %s695 = smul.addr %s691, 16
        %s696 = sadd.s32 %s694, %s695
        %s697 = smul.addr %s696, 8
        %s698 = scalar_lea.vmem %s2, %s697
      $region44: #{module_forward.2} parent=35 // pred_fallthru
        _
    $region36: #{module_forward.2} parent=5 // pred_fallthru
      _
  $region6: #{module_forward.2} parent=0 // loop_footer
    %s13 = sadd.s32 1, %s9
  $region7: #{module_forward.2} parent=0 // loop_footer_branch
    %8 = sbr.rel target = $region3
  $region8: #{module_forward.2} parent=0 // loop_exit
    _

// kernel: module_forward.3
$region0: #{module_forward.3}
  #allocation0 [shape = 'u32[]', space=smem, size = 0x4, offset = 0x4, fixed_abs, tag = 'smem constant byte address 0x4 - core index']
  #allocation1 [shape = 'u32[144,128]{1,0:T(1,128)}', space=vmem, size = 0x12000, scoped, tag = 'internal scratch']
  %s0 = inlined_call_operand.vmem [shape: f32[2,128,400], index: 0, kind: input, shape index: {}]
  %s1 = inlined_call_operand.vmem [shape: f32[2,128,400], index: 1, kind: input, shape index: {}]
  %s2 = inlined_call_operand.vmem [shape: f32[128,1], index: 2, kind: input, shape index: {}]
  %s3 = inlined_call_operand.vmem [shape: f32[128,1], index: 3, kind: input, shape index: {}]
  %s4 = inlined_call_operand.vmem [shape: f32[256,128], index: 4, kind: input, shape index: {}]
  %s5 = inlined_call_operand.vmem [shape: f32[2,256,400], index: 5, kind: output, shape index: {}]
  %s6 = sld [smem:[#allocation0]]
  $region53: #{module_forward.3} parent=0
    _
  %s8 = ssub.s32 1, %s6
  %s9 = scalar_select 0, %s8, %s6
  loop: start=0, step=1, limit=4
  $region2: #{module_forward.3} parent=0 // loop_pre_header
    _
  $region3: #{module_forward.3} parent=0 // loop_header
    %s11 = sphi 0, %s15
    %p12 = scmp.ge.s32.totalorder %s11, 4
    %s18 = sphi 0, %s30
    %s19 = sphi 0, %s26
    %s20 = sphi 0, %s18
    %s21 = sphi 0, %s19
    %s22 = sphi 0, %s20
    %s23 = sphi 0, %s21
    %s35 = sphi 0, %s37
    %s38 = sphi 0, %s35
    %s39 = sphi 0, %s38
    %s55 = sphi 0, %s39
    %s63 = sphi 0, %s65
    %s66 = sphi 0, %s63
    %s67 = sphi 0, %s66
    %s83 = sphi 0, %s67
    %s87 = sphi 0, %s87
    %s89 = sphi 0, %s87
    %s90 = sphi 0, %s89
    %s104 = sphi 0, %s90
    %s108 = sphi 0, %s108
    %s110 = sphi 0, %s108
    %s111 = sphi 0, %s110
    %s125 = sphi 0, %s111
    %s129 = sphi 0, %s129
    %s131 = sphi 0, %s129
    %s132 = sphi 0, %s131
    %s146 = sphi 0, %s132
    %s154 = sphi 0, %s156
    %s157 = sphi 0, %s154
    %s158 = sphi 0, %s157
    %s174 = sphi 0, %s158
  $region4: #{module_forward.3} parent=0 // loop_header_branch
    %14 = sbr.rel (%p12) target = $region8
  $region5: #{module_forward.3} parent=0 // loop_body
    %s16 = ssub.s32 %s11, 1
    %s17 = ssub.s32 %s11, 2
    %s24 = sadd.s32 1, %s19
    %p25 = scmp.ge.s32.totalorder %s24, 1
    %s26 = scalar_select %p25, 0, %s24
    %s27 = sadd.s32 1, %s18
    %s28 = scalar_select %p25, %s27, %s18
    %p29 = scmp.ge.s32.totalorder %s28, 2
    %s30 = scalar_select %p29, 0, %s28
    %s31 = ssub.s32 %s18, %s30
    %s32 = ssub.s32 %s19, %s26
    %s33 = sor.u32 %s31, %s32
    %p34 = scmp.eq.s32.totalorder %s33, 0
    %s36 = sadd.s32 %s35, 1
    %s37 = scalar_select %p34, %s35, %s36
    %p40 = pneg %p34
    %p41 = scmp.eq.s32.totalorder %s11, 1
    %p42 = por %p40, %p41
    %p43 = scmp.ne.s32.totalorder %s35, %s38
    %p44 = scmp.eq.s32.totalorder %s11, 0
    %p45 = por %p43, %p44
    %p46 = scmp.ne.s32.totalorder %s35, %s38
    %p47 = scmp.eq.s32.totalorder %s16, 1
    %p48 = por %p46, %p47
    %p49 = scmp.ne.s32.totalorder %s38, %s39
    %p50 = scmp.eq.s32.totalorder %s16, 0
    %p51 = por %p49, %p50
    %p52 = scmp.ne.s32.totalorder %s38, %s39
    %p53 = scmp.eq.s32.totalorder %s17, 1
    %p54 = por %p52, %p53
    %p56 = scmp.ne.s32.totalorder %s39, %s55
    %p57 = scmp.eq.s32.totalorder %s17, 0
    %p58 = por %p56, %p57
    %s59 = ssub.s32 %s18, %s30
    %s60 = ssub.s32 %s19, %s26
    %s61 = sor.u32 %s59, %s60
    %p62 = scmp.eq.s32.totalorder %s61, 0
    %s64 = sadd.s32 %s63, 1
    %s65 = scalar_select %p62, %s63, %s64
    %p68 = pneg %p62
    %p69 = scmp.eq.s32.totalorder %s11, 1
    %p70 = por %p68, %p69
    %p71 = scmp.ne.s32.totalorder %s63, %s66
    %p72 = scmp.eq.s32.totalorder %s11, 0
    %p73 = por %p71, %p72
    %p74 = scmp.ne.s32.totalorder %s63, %s66
    %p75 = scmp.eq.s32.totalorder %s16, 1
    %p76 = por %p74, %p75
    %p77 = scmp.ne.s32.totalorder %s66, %s67
    %p78 = scmp.eq.s32.totalorder %s16, 0
    %p79 = por %p77, %p78
    %p80 = scmp.ne.s32.totalorder %s66, %s67
    %p81 = scmp.eq.s32.totalorder %s17, 1
    %p82 = por %p80, %p81
    %p84 = scmp.ne.s32.totalorder %s67, %s83
    %p85 = scmp.eq.s32.totalorder %s17, 0
    %p86 = por %p84, %p85
    %s88 = sadd.s32 %s87, 1
    %p91 = scmp.eq.s32.totalorder %s11, 1
    %p92 = scmp.ne.s32.totalorder %s87, %s89
    %p93 = scmp.eq.s32.totalorder %s11, 0
    %p94 = por %p92, %p93
    %p95 = scmp.ne.s32.totalorder %s87, %s89
    %p96 = scmp.eq.s32.totalorder %s16, 1
    %p97 = por %p95, %p96
    %p98 = scmp.ne.s32.totalorder %s89, %s90
    %p99 = scmp.eq.s32.totalorder %s16, 0
    %p100 = por %p98, %p99
    %p101 = scmp.ne.s32.totalorder %s89, %s90
    %p102 = scmp.eq.s32.totalorder %s17, 1
    %p103 = por %p101, %p102
    %p105 = scmp.ne.s32.totalorder %s90, %s104
    %p106 = scmp.eq.s32.totalorder %s17, 0
    %p107 = por %p105, %p106
    %s109 = sadd.s32 %s108, 1
    %p112 = scmp.eq.s32.totalorder %s11, 1
    %p113 = scmp.ne.s32.totalorder %s108, %s110
    %p114 = scmp.eq.s32.totalorder %s11, 0
    %p115 = por %p113, %p114
    %p116 = scmp.ne.s32.totalorder %s108, %s110
    %p117 = scmp.eq.s32.totalorder %s16, 1
    %p118 = por %p116, %p117
    %p119 = scmp.ne.s32.totalorder %s110, %s111
    %p120 = scmp.eq.s32.totalorder %s16, 0
    %p121 = por %p119, %p120
    %p122 = scmp.ne.s32.totalorder %s110, %s111
    %p123 = scmp.eq.s32.totalorder %s17, 1
    %p124 = por %p122, %p123
    %p126 = scmp.ne.s32.totalorder %s111, %s125
    %p127 = scmp.eq.s32.totalorder %s17, 0
    %p128 = por %p126, %p127
    %s130 = sadd.s32 %s129, 1
    %p133 = scmp.eq.s32.totalorder %s11, 1
    %p134 = scmp.ne.s32.totalorder %s129, %s131
    %p135 = scmp.eq.s32.totalorder %s11, 0
    %p136 = por %p134, %p135
    %p137 = scmp.ne.s32.totalorder %s129, %s131
    %p138 = scmp.eq.s32.totalorder %s16, 1
    %p139 = por %p137, %p138
    %p140 = scmp.ne.s32.totalorder %s131, %s132
    %p141 = scmp.eq.s32.totalorder %s16, 0
    %p142 = por %p140, %p141
    %p143 = scmp.ne.s32.totalorder %s131, %s132
    %p144 = scmp.eq.s32.totalorder %s17, 1
    %p145 = por %p143, %p144
    %p147 = scmp.ne.s32.totalorder %s132, %s146
    %p148 = scmp.eq.s32.totalorder %s17, 0
    %p149 = por %p147, %p148
    %s150 = ssub.s32 %s18, %s30
    %s151 = ssub.s32 %s19, %s26
    %s152 = sor.u32 %s150, %s151
    %p153 = scmp.eq.s32.totalorder %s152, 0
    %s155 = sadd.s32 %s154, 1
    %s156 = scalar_select %p153, %s154, %s155
    %p159 = pneg %p153
    %p160 = scmp.eq.s32.totalorder %s11, 1
    %p161 = por %p159, %p160
    %p162 = scmp.ne.s32.totalorder %s154, %s157
    %p163 = scmp.eq.s32.totalorder %s11, 0
    %p164 = por %p162, %p163
    %p165 = scmp.ne.s32.totalorder %s154, %s157
    %p166 = scmp.eq.s32.totalorder %s16, 1
    %p167 = por %p165, %p166
    %p168 = scmp.ne.s32.totalorder %s157, %s158
    %p169 = scmp.eq.s32.totalorder %s16, 0
    %p170 = por %p168, %p169
    %p171 = scmp.ne.s32.totalorder %s157, %s158
    %p172 = scmp.eq.s32.totalorder %s17, 1
    %p173 = por %p171, %p172
    %p175 = scmp.ne.s32.totalorder %s158, %s174
    %p176 = scmp.eq.s32.totalorder %s17, 0
    %p177 = por %p175, %p176
    %p178 = scmp.le.s32.totalorder 1, %s11
    %p179 = scmp.lt.s32.totalorder %s11, 3
    %p180 = pnand %p178, %p179
    %p181 = pneg %p180
    // Predicated region
    $region9: #{module_forward.3} parent=5 // pred_check
      _
    $region10: #{module_forward.3} parent=5 // pred_check_branch
      %183 = sbr.rel (%p180) target = $region12
    $region11: #{module_forward.3} parent=5 // pred_region
      %s184 = ssub.s32 %s11, 1
      // Predicated region
      $region13: #{module_forward.3} parent=11 // pred_check
        %p185 = pneg %p100
      $region14: #{module_forward.3} parent=11 // pred_check_branch
        %187 = sbr.rel (%p185) target = $region16
      $region15: #{module_forward.3} parent=11 // pred_region
        _
      $region16: #{module_forward.3} parent=11 // pred_fallthru
        _
      // Predicated region
      $region17: #{module_forward.3} parent=11 // pred_check
        %p188 = pneg %p121
      $region18: #{module_forward.3} parent=11 // pred_check_branch
        %190 = sbr.rel (%p188) target = $region20
      $region19: #{module_forward.3} parent=11 // pred_region
        _
      $region20: #{module_forward.3} parent=11 // pred_fallthru
        _
      // Predicated region
      $region21: #{module_forward.3} parent=11 // pred_check
        %p191 = pneg %p142
      $region22: #{module_forward.3} parent=11 // pred_check_branch
        %193 = sbr.rel (%p191) target = $region24
      $region23: #{module_forward.3} parent=11 // pred_region
        _
      $region24: #{module_forward.3} parent=11 // pred_fallthru
        _
    $region12: #{module_forward.3} parent=5 // pred_fallthru
      _
    %p194 = scmp.lt.s32.totalorder %s11, 2
    // Predicated region
    $region25: #{module_forward.3} parent=5 // pred_check
      %p195 = pneg %p194
    $region26: #{module_forward.3} parent=5 // pred_check_branch
      %197 = sbr.rel (%p195) target = $region28
    $region27: #{module_forward.3} parent=5 // pred_region
      // Predicated region
      $region29: #{module_forward.3} parent=27 // pred_check
        %p198 = pneg %p45
      $region30: #{module_forward.3} parent=27 // pred_check_branch
        %200 = sbr.rel (%p198) target = $region32
      $region31: #{module_forward.3} parent=27 // pred_region
        %s201 = smul.u32 4, %s19
        %p202 = scmp.lt.s32.totalorder %s18, 1
        %s203 = scalar_select %p202, %s18, 1
        %p204 = scmp.lt.s32.totalorder %s201, 3
        %s205 = scalar_select %p204, %s201, 3
        %s206 = smul.addr %s203, 64
        %s207 = sadd.s32 %s205, %s206
        %s208 = smul.addr %s207, 8
        %s209 = scalar_lea.vmem %s0, %s208
        %s210 = smul.u32 4, %s19
      $region32: #{module_forward.3} parent=27 // pred_fallthru
        _
      // Predicated region
      $region33: #{module_forward.3} parent=27 // pred_check
        %p211 = pneg %p73
      $region34: #{module_forward.3} parent=27 // pred_check_branch
        %213 = sbr.rel (%p211) target = $region36
      $region35: #{module_forward.3} parent=27 // pred_region
        %s214 = smul.u32 4, %s19
        %p215 = scmp.lt.s32.totalorder %s18, 1
        %s216 = scalar_select %p215, %s18, 1
        %p217 = scmp.lt.s32.totalorder %s214, 3
        %s218 = scalar_select %p217, %s214, 3
        %s219 = smul.addr %s216, 64
        %s220 = sadd.s32 %s218, %s219
        %s221 = smul.addr %s220, 8
        %s222 = scalar_lea.vmem %s1, %s221
        %s223 = smul.u32 4, %s19
      $region36: #{module_forward.3} parent=27 // pred_fallthru
        _
    $region28: #{module_forward.3} parent=5 // pred_fallthru
      _
    %p224 = scmp.le.s32.totalorder 1, %s11
    %p225 = scmp.lt.s32.totalorder %s11, 3
    %p226 = pnand %p224, %p225
    %p227 = pneg %p226
    // Predicated region
    $region37: #{module_forward.3} parent=5 // pred_check
      _
    $region38: #{module_forward.3} parent=5 // pred_check_branch
      %229 = sbr.rel (%p226) target = $region40
    $region39: #{module_forward.3} parent=5 // pred_region
      %s230 = ssub.s32 %s11, 1
      %s231 = smul.u32 4, %s21
      %p232 = scmp.lt.s32.totalorder %s20, 1
      %s233 = scalar_select %p232, %s20, 1
      %p234 = scmp.lt.s32.totalorder %s231, 3
      %s235 = scalar_select %p234, %s231, 3
      %s236 = smul.addr %s233, 64
      %s237 = sadd.s32 %s235, %s236
      %s238 = smul.addr %s237, 8
      %s239 = scalar_lea.vmem %s0, %s238
      %p240 = pneg %p51
      %p241 = pneg %p48
      %s242 = smul.u32 4, %s21
      %p243 = scmp.lt.s32.totalorder %s20, 1
      %s244 = scalar_select %p243, %s20, 1
      %p245 = scmp.lt.s32.totalorder %s242, 3
      %s246 = scalar_select %p245, %s242, 3
      %s247 = smul.addr %s244, 64
      %s248 = sadd.s32 %s246, %s247
      %s249 = smul.addr %s248, 8
      %s250 = scalar_lea.vmem %s1, %s249
      %p251 = pneg %p79
      %p252 = pneg %p76
      %p253 = pneg %p100
      %p254 = pneg %p97
      %p255 = pneg %p121
      %p256 = pneg %p118
      %p257 = pneg %p142
      %p258 = pneg %p139
      %p259 = pneg %p170
      %p260 = pneg %p167
      %s261 = smul.u32 4, %s21
      %p262 = scmp.lt.s32.totalorder %s20, 1
      %s263 = scalar_select %p262, %s20, 1
      %p264 = scmp.lt.s32.totalorder %s261, 3
      %s265 = scalar_select %p264, %s261, 3
      %s266 = smul.addr %s263, 128
      %s267 = sadd.s32 %s265, %s266
      %s268 = smul.addr %s267, 8
      %s269 = scalar_lea.vmem %s5, %s268
      %s270 = smul.u32 4, %s21
      %p271 = scmp.lt.s32.totalorder %s20, 1
      %s272 = scalar_select %p271, %s20, 1
      %p273 = scmp.lt.s32.totalorder %s270, 3
      %s274 = scalar_select %p273, %s270, 3
      %s275 = smul.addr %s272, 64
      %s276 = sadd.s32 %s274, %s275
      %s277 = smul.addr %s276, 8
      %s278 = scalar_lea.vmem %s0, %s277
      %s279 = smul.u32 4, %s21
      %s280 = smul.u32 4, %s21
      %p281 = scmp.lt.s32.totalorder %s20, 1
      %s282 = scalar_select %p281, %s20, 1
      %p283 = scmp.lt.s32.totalorder %s280, 3
      %s284 = scalar_select %p283, %s280, 3
      %s285 = smul.addr %s282, 64
      %s286 = sadd.s32 %s284, %s285
      %s287 = smul.addr %s286, 8
      %s288 = scalar_lea.vmem %s1, %s287
      %s289 = smul.u32 4, %s21
      %s290 = smul.u32 4, %s21
      %p291 = scmp.lt.s32.totalorder %s20, 1
      %s292 = scalar_select %p291, %s20, 1
      %p293 = scmp.lt.s32.totalorder %s290, 3
      %s294 = scalar_select %p293, %s290, 3
      %s295 = smul.addr %s292, 128
      %s296 = sadd.s32 %s294, %s295
      %s297 = smul.addr %s296, 8
      %s298 = scalar_lea.vmem %s5, %s297
      %s299 = smul.u32 4, %s21
      %v300 = vld [vmem:[%s278] sm:$0xff]
      %v301 = vld [vmem:[%s278 + $0x8] sm:$0xff]
      %v302 = vld [vmem:[%s278 + $0x10] sm:$0xff]
      %v303 = vld [vmem:[%s278 + $0x18] sm:$0xff]
      %v304 = vld [vmem:[%s278 + $0x20] sm:$0xff]
      %v305 = vld [vmem:[%s278 + $0x28] sm:$0xff]
      %v306 = vld [vmem:[%s278 + $0x30] sm:$0xff]
      %v307 = vld [vmem:[%s278 + $0x38] sm:$0xff]
      %v308 = vld [vmem:[%s278 + $0x40] sm:$0xff]
      %v309 = vld [vmem:[%s278 + $0x48] sm:$0xff]
      %v310 = vld [vmem:[%s278 + $0x50] sm:$0xff]
      %v311 = vld [vmem:[%s278 + $0x58] sm:$0xff]
      %v312 = vld [vmem:[%s278 + $0x60] sm:$0xff]
      %v313 = vld [vmem:[%s278 + $0x68] sm:$0xff]
      %v314 = vld [vmem:[%s278 + $0x70] sm:$0xff]
      %v315 = vld [vmem:[%s278 + $0x78] sm:$0xff]
      %v316 = vld [vmem:[%s278 + $0x80] sm:$0xff]
      %v317 = vld [vmem:[%s278 + $0x88] sm:$0xff]
      %v318 = vld [vmem:[%s278 + $0x90] sm:$0xff]
      %v319 = vld [vmem:[%s278 + $0x98] sm:$0xff]
      %v320 = vld [vmem:[%s278 + $0xa0] sm:$0xff]
      %v321 = vld [vmem:[%s278 + $0xa8] sm:$0xff]
      %v322 = vld [vmem:[%s278 + $0xb0] sm:$0xff]
      %v323 = vld [vmem:[%s278 + $0xb8] sm:$0xff]
      %v324 = vld [vmem:[%s278 + $0xc0] sm:$0xff]
      %v325 = vld [vmem:[%s278 + $0xc8] sm:$0xff]
      %v326 = vld [vmem:[%s278 + $0xd0] sm:$0xff]
      %v327 = vld [vmem:[%s278 + $0xd8] sm:$0xff]
      %v328 = vld [vmem:[%s278 + $0xe0] sm:$0xff]
      %v329 = vld [vmem:[%s278 + $0xe8] sm:$0xff]
      %v330 = vld [vmem:[%s278 + $0xf0] sm:$0xff]
      %v331 = vld [vmem:[%s278 + $0xf8] sm:$0xff]
      %v332 = vld [vmem:[%s278 + $0x100] sm:$0xff]
      %v333 = vld [vmem:[%s278 + $0x108] sm:$0xff]
      %v334 = vld [vmem:[%s278 + $0x110] sm:$0xff]
      %v335 = vld [vmem:[%s278 + $0x118] sm:$0xff]
      %v336 = vld [vmem:[%s278 + $0x120] sm:$0xff]
      %v337 = vld [vmem:[%s278 + $0x128] sm:$0xff]
      %v338 = vld [vmem:[%s278 + $0x130] sm:$0xff]
      %v339 = vld [vmem:[%s278 + $0x138] sm:$0xff]
      %v340 = vld [vmem:[%s278 + $0x140] sm:$0xff]
      %v341 = vld [vmem:[%s278 + $0x148] sm:$0xff]
      %v342 = vld [vmem:[%s278 + $0x150] sm:$0xff]
      %v343 = vld [vmem:[%s278 + $0x158] sm:$0xff]
      %v344 = vld [vmem:[%s278 + $0x160] sm:$0xff]
      %v345 = vld [vmem:[%s278 + $0x168] sm:$0xff]
      %v346 = vld [vmem:[%s278 + $0x170] sm:$0xff]
      %v347 = vld [vmem:[%s278 + $0x178] sm:$0xff]
      %v348 = vld [vmem:[%s278 + $0x180] sm:$0xff]
      %v349 = vld [vmem:[%s278 + $0x188] sm:$0xff]
      %v350 = vld [vmem:[%s278 + $0x190] sm:$0xff]
      %v351 = vld [vmem:[%s278 + $0x198] sm:$0xff]
      %v352 = vld [vmem:[%s278 + $0x1a0] sm:$0xff]
      %v353 = vld [vmem:[%s278 + $0x1a8] sm:$0xff]
      %v354 = vld [vmem:[%s278 + $0x1b0] sm:$0xff]
      %v355 = vld [vmem:[%s278 + $0x1b8] sm:$0xff]
      %v356 = vld [vmem:[%s278 + $0x1c0] sm:$0xff]
      %v357 = vld [vmem:[%s278 + $0x1c8] sm:$0xff]
      %v358 = vld [vmem:[%s278 + $0x1d0] sm:$0xff]
      %v359 = vld [vmem:[%s278 + $0x1d8] sm:$0xff]
      %v360 = vld [vmem:[%s278 + $0x1e0] sm:$0xff]
      %v361 = vld [vmem:[%s278 + $0x1e8] sm:$0xff]
      %v362 = vld [vmem:[%s278 + $0x1f0] sm:$0xff]
      %v363 = vld [vmem:[%s278 + $0x1f8] sm:$0xff]
      %v364 = vld [vmem:[%s2] sm:$0xff]
      %v365 = vld [vmem:[%s2 + $0x8] sm:$0xff]
      %v366 = vld [vmem:[%s2 + $0x10] sm:$0xff]
      %v367 = vld [vmem:[%s2 + $0x18] sm:$0xff]
      %v368 = vld [vmem:[%s2 + $0x20] sm:$0xff]
      %v369 = vld [vmem:[%s2 + $0x28] sm:$0xff]
      %v370 = vld [vmem:[%s2 + $0x30] sm:$0xff]
      %v371 = vld [vmem:[%s2 + $0x38] sm:$0xff]
      %v372 = vld [vmem:[%s2 + $0x40] sm:$0xff]
      %v373 = vld [vmem:[%s2 + $0x48] sm:$0xff]
      %v374 = vld [vmem:[%s2 + $0x50] sm:$0xff]
      %v375 = vld [vmem:[%s2 + $0x58] sm:$0xff]
      %v376 = vld [vmem:[%s2 + $0x60] sm:$0xff]
      %v377 = vld [vmem:[%s2 + $0x68] sm:$0xff]
      %v378 = vld [vmem:[%s2 + $0x70] sm:$0xff]
      %v379 = vld [vmem:[%s2 + $0x78] sm:$0xff]
      %381 = vset.pattern.permute.xlu0 0
      %382 = vperm.xlu0 %381, %v364
      %v383 = vpop.permute.xlu0 %382
      %386 = vset.pattern.permute.xlu0 0
      %387 = vperm.xlu0 %386, %v365
      %v388 = vpop.permute.xlu0 %387
      %391 = vset.pattern.permute.xlu0 0
      %392 = vperm.xlu0 %391, %v366
      %v393 = vpop.permute.xlu0 %392
      %396 = vset.pattern.permute.xlu0 0
      %397 = vperm.xlu0 %396, %v367
      %v398 = vpop.permute.xlu0 %397
      %401 = vset.pattern.permute.xlu0 0
      %402 = vperm.xlu0 %401, %v368
      %v403 = vpop.permute.xlu0 %402
      %406 = vset.pattern.permute.xlu0 0
      %407 = vperm.xlu0 %406, %v369
      %v408 = vpop.permute.xlu0 %407
      %411 = vset.pattern.permute.xlu0 0
      %412 = vperm.xlu0 %411, %v370
      %v413 = vpop.permute.xlu0 %412
      %416 = vset.pattern.permute.xlu0 0
      %417 = vperm.xlu0 %416, %v371
      %v418 = vpop.permute.xlu0 %417
      %421 = vset.pattern.permute.xlu0 0
      %422 = vperm.xlu0 %421, %v372
      %v423 = vpop.permute.xlu0 %422
      %426 = vset.pattern.permute.xlu0 0
      %427 = vperm.xlu0 %426, %v373
      %v428 = vpop.permute.xlu0 %427
      %431 = vset.pattern.permute.xlu0 0
      %432 = vperm.xlu0 %431, %v374
      %v433 = vpop.permute.xlu0 %432
      %436 = vset.pattern.permute.xlu0 0
      %437 = vperm.xlu0 %436, %v375
      %v438 = vpop.permute.xlu0 %437
      %441 = vset.pattern.permute.xlu0 0
      %442 = vperm.xlu0 %441, %v376
      %v443 = vpop.permute.xlu0 %442
      %446 = vset.pattern.permute.xlu0 0
      %447 = vperm.xlu0 %446, %v377
      %v448 = vpop.permute.xlu0 %447
      %451 = vset.pattern.permute.xlu0 0
      %452 = vperm.xlu0 %451, %v378
      %v453 = vpop.permute.xlu0 %452
      %456 = vset.pattern.permute.xlu0 0
      %457 = vperm.xlu0 %456, %v379
      %v458 = vpop.permute.xlu0 %457
      %v460 = vmul.f32 %v300, %v383
      %v461 = vmul.f32 %v301, %v383
      %v462 = vmul.f32 %v302, %v383
      %v463 = vmul.f32 %v303, %v383
      %v464 = vmul.f32 %v304, %v388
      %v465 = vmul.f32 %v305, %v388
      %v466 = vmul.f32 %v306, %v388
      %v467 = vmul.f32 %v307, %v388
      %v468 = vmul.f32 %v308, %v393
      %v469 = vmul.f32 %v309, %v393
      %v470 = vmul.f32 %v310, %v393
      %v471 = vmul.f32 %v311, %v393
      %v472 = vmul.f32 %v312, %v398
      %v473 = vmul.f32 %v313, %v398
      %v474 = vmul.f32 %v314, %v398
      %v475 = vmul.f32 %v315, %v398
      %v476 = vmul.f32 %v316, %v403
      %v477 = vmul.f32 %v317, %v403
      %v478 = vmul.f32 %v318, %v403
      %v479 = vmul.f32 %v319, %v403
      %v480 = vmul.f32 %v320, %v408
      %v481 = vmul.f32 %v321, %v408
      %v482 = vmul.f32 %v322, %v408
      %v483 = vmul.f32 %v323, %v408
      %v484 = vmul.f32 %v324, %v413
      %v485 = vmul.f32 %v325, %v413
      %v486 = vmul.f32 %v326, %v413
      %v487 = vmul.f32 %v327, %v413
      %v488 = vmul.f32 %v328, %v418
      %v489 = vmul.f32 %v329, %v418
      %v490 = vmul.f32 %v330, %v418
      %v491 = vmul.f32 %v331, %v418
      %v492 = vmul.f32 %v332, %v423
      %v493 = vmul.f32 %v333, %v423
      %v494 = vmul.f32 %v334, %v423
      %v495 = vmul.f32 %v335, %v423
      %v496 = vmul.f32 %v336, %v428
      %v497 = vmul.f32 %v337, %v428
      %v498 = vmul.f32 %v338, %v428
      %v499 = vmul.f32 %v339, %v428
      %v500 = vmul.f32 %v340, %v433
      %v501 = vmul.f32 %v341, %v433
      %v502 = vmul.f32 %v342, %v433
      %v503 = vmul.f32 %v343, %v433
      %v504 = vmul.f32 %v344, %v438
      %v505 = vmul.f32 %v345, %v438
      %v506 = vmul.f32 %v346, %v438
      %v507 = vmul.f32 %v347, %v438
      %v508 = vmul.f32 %v348, %v443
      %v509 = vmul.f32 %v349, %v443
      %v510 = vmul.f32 %v350, %v443
      %v511 = vmul.f32 %v351, %v443
      %v512 = vmul.f32 %v352, %v448
      %v513 = vmul.f32 %v353, %v448
      %v514 = vmul.f32 %v354, %v448
      %v515 = vmul.f32 %v355, %v448
      %v516 = vmul.f32 %v356, %v453
      %v517 = vmul.f32 %v357, %v453
      %v518 = vmul.f32 %v358, %v453
      %v519 = vmul.f32 %v359, %v453
      %v520 = vmul.f32 %v360, %v458
      %v521 = vmul.f32 %v361, %v458
      %v522 = vmul.f32 %v362, %v458
      %v523 = vmul.f32 %v363, %v458
      %v524 = vld [vmem:[%s3] sm:$0xff]
      %v525 = vld [vmem:[%s3 + $0x8] sm:$0xff]
      %v526 = vld [vmem:[%s3 + $0x10] sm:$0xff]
      %v527 = vld [vmem:[%s3 + $0x18] sm:$0xff]
      %v528 = vld [vmem:[%s3 + $0x20] sm:$0xff]
      %v529 = vld [vmem:[%s3 + $0x28] sm:$0xff]
      %v530 = vld [vmem:[%s3 + $0x30] sm:$0xff]
      %v531 = vld [vmem:[%s3 + $0x38] sm:$0xff]
      %v532 = vld [vmem:[%s3 + $0x40] sm:$0xff]
      %v533 = vld [vmem:[%s3 + $0x48] sm:$0xff]
      %v534 = vld [vmem:[%s3 + $0x50] sm:$0xff]
      %v535 = vld [vmem:[%s3 + $0x58] sm:$0xff]
      %v536 = vld [vmem:[%s3 + $0x60] sm:$0xff]
      %v537 = vld [vmem:[%s3 + $0x68] sm:$0xff]
      %v538 = vld [vmem:[%s3 + $0x70] sm:$0xff]
      %v539 = vld [vmem:[%s3 + $0x78] sm:$0xff]
      %541 = vset.pattern.permute.xlu0 0
      %542 = vperm.xlu0 %541, %v524
      %v543 = vpop.permute.xlu0 %542
      %546 = vset.pattern.permute.xlu0 0
      %547 = vperm.xlu0 %546, %v525
      %v548 = vpop.permute.xlu0 %547
      %551 = vset.pattern.permute.xlu0 0
      %552 = vperm.xlu0 %551, %v526
      %v553 = vpop.permute.xlu0 %552
      %556 = vset.pattern.permute.xlu0 0
      %557 = vperm.xlu0 %556, %v527
      %v558 = vpop.permute.xlu0 %557
      %561 = vset.pattern.permute.xlu0 0
      %562 = vperm.xlu0 %561, %v528
      %v563 = vpop.permute.xlu0 %562
      %566 = vset.pattern.permute.xlu0 0
      %567 = vperm.xlu0 %566, %v529
      %v568 = vpop.permute.xlu0 %567
      %571 = vset.pattern.permute.xlu0 0
      %572 = vperm.xlu0 %571, %v530
      %v573 = vpop.permute.xlu0 %572
      %576 = vset.pattern.permute.xlu0 0
      %577 = vperm.xlu0 %576, %v531
      %v578 = vpop.permute.xlu0 %577
      %581 = vset.pattern.permute.xlu0 0
      %582 = vperm.xlu0 %581, %v532
      %v583 = vpop.permute.xlu0 %582
      %586 = vset.pattern.permute.xlu0 0
      %587 = vperm.xlu0 %586, %v533
      %v588 = vpop.permute.xlu0 %587
      %591 = vset.pattern.permute.xlu0 0
      %592 = vperm.xlu0 %591, %v534
      %v593 = vpop.permute.xlu0 %592
      %596 = vset.pattern.permute.xlu0 0
      %597 = vperm.xlu0 %596, %v535
      %v598 = vpop.permute.xlu0 %597
      %601 = vset.pattern.permute.xlu0 0
      %602 = vperm.xlu0 %601, %v536
      %v603 = vpop.permute.xlu0 %602
      %606 = vset.pattern.permute.xlu0 0
      %607 = vperm.xlu0 %606, %v537
      %v608 = vpop.permute.xlu0 %607
      %611 = vset.pattern.permute.xlu0 0
      %612 = vperm.xlu0 %611, %v538
      %v613 = vpop.permute.xlu0 %612
      %616 = vset.pattern.permute.xlu0 0
      %617 = vperm.xlu0 %616, %v539
      %v618 = vpop.permute.xlu0 %617
      %v620 = vadd.f32 %v460, %v543
      %v621 = vadd.f32 %v461, %v543
      %v622 = vadd.f32 %v462, %v543
      %v623 = vadd.f32 %v463, %v543
      %v624 = vadd.f32 %v464, %v548
      %v625 = vadd.f32 %v465, %v548
      %v626 = vadd.f32 %v466, %v548
      %v627 = vadd.f32 %v467, %v548
      %v628 = vadd.f32 %v468, %v553
      %v629 = vadd.f32 %v469, %v553
      %v630 = vadd.f32 %v470, %v553
      %v631 = vadd.f32 %v471, %v553
      %v632 = vadd.f32 %v472, %v558
      %v633 = vadd.f32 %v473, %v558
      %v634 = vadd.f32 %v474, %v558
      %v635 = vadd.f32 %v475, %v558
      %v636 = vadd.f32 %v476, %v563
      %v637 = vadd.f32 %v477, %v563
      %v638 = vadd.f32 %v478, %v563
      %v639 = vadd.f32 %v479, %v563
      %v640 = vadd.f32 %v480, %v568
      %v641 = vadd.f32 %v481, %v568
      %v642 = vadd.f32 %v482, %v568
      %v643 = vadd.f32 %v483, %v568
      %v644 = vadd.f32 %v484, %v573
      %v645 = vadd.f32 %v485, %v573
      %v646 = vadd.f32 %v486, %v573
      %v647 = vadd.f32 %v487, %v573
      %v648 = vadd.f32 %v488, %v578
      %v649 = vadd.f32 %v489, %v578
      %v650 = vadd.f32 %v490, %v578
      %v651 = vadd.f32 %v491, %v578
      %v652 = vadd.f32 %v492, %v583
      %v653 = vadd.f32 %v493, %v583
      %v654 = vadd.f32 %v494, %v583
      %v655 = vadd.f32 %v495, %v583
      %v656 = vadd.f32 %v496, %v588
      %v657 = vadd.f32 %v497, %v588
      %v658 = vadd.f32 %v498, %v588
      %v659 = vadd.f32 %v499, %v588
      %v660 = vadd.f32 %v500, %v593
      %v661 = vadd.f32 %v501, %v593
      %v662 = vadd.f32 %v502, %v593
      %v663 = vadd.f32 %v503, %v593
      %v664 = vadd.f32 %v504, %v598
      %v665 = vadd.f32 %v505, %v598
      %v666 = vadd.f32 %v506, %v598
      %v667 = vadd.f32 %v507, %v598
      %v668 = vadd.f32 %v508, %v603
      %v669 = vadd.f32 %v509, %v603
      %v670 = vadd.f32 %v510, %v603
      %v671 = vadd.f32 %v511, %v603
      %v672 = vadd.f32 %v512, %v608
      %v673 = vadd.f32 %v513, %v608
      %v674 = vadd.f32 %v514, %v608
      %v675 = vadd.f32 %v515, %v608
      %v676 = vadd.f32 %v516, %v613
      %v677 = vadd.f32 %v517, %v613
      %v678 = vadd.f32 %v518, %v613
      %v679 = vadd.f32 %v519, %v613
      %v680 = vadd.f32 %v520, %v618
      %v681 = vadd.f32 %v521, %v618
      %v682 = vadd.f32 %v522, %v618
      %v683 = vadd.f32 %v523, %v618
      %v684 = vld [vmem:[%s288] sm:$0xff]
      %v685 = vld [vmem:[%s288 + $0x8] sm:$0xff]
      %v686 = vld [vmem:[%s288 + $0x10] sm:$0xff]
      %v687 = vld [vmem:[%s288 + $0x18] sm:$0xff]
      %v688 = vld [vmem:[%s288 + $0x20] sm:$0xff]
      %v689 = vld [vmem:[%s288 + $0x28] sm:$0xff]
      %v690 = vld [vmem:[%s288 + $0x30] sm:$0xff]
      %v691 = vld [vmem:[%s288 + $0x38] sm:$0xff]
      %v692 = vld [vmem:[%s288 + $0x40] sm:$0xff]
      %v693 = vld [vmem:[%s288 + $0x48] sm:$0xff]
      %v694 = vld [vmem:[%s288 + $0x50] sm:$0xff]
      %v695 = vld [vmem:[%s288 + $0x58] sm:$0xff]
      %v696 = vld [vmem:[%s288 + $0x60] sm:$0xff]
      %v697 = vld [vmem:[%s288 + $0x68] sm:$0xff]
      %v698 = vld [vmem:[%s288 + $0x70] sm:$0xff]
      %v699 = vld [vmem:[%s288 + $0x78] sm:$0xff]
      %v700 = vld [vmem:[%s288 + $0x80] sm:$0xff]
      %v701 = vld [vmem:[%s288 + $0x88] sm:$0xff]
      %v702 = vld [vmem:[%s288 + $0x90] sm:$0xff]
      %v703 = vld [vmem:[%s288 + $0x98] sm:$0xff]
      %v704 = vld [vmem:[%s288 + $0xa0] sm:$0xff]
      %v705 = vld [vmem:[%s288 + $0xa8] sm:$0xff]
      %v706 = vld [vmem:[%s288 + $0xb0] sm:$0xff]
      %v707 = vld [vmem:[%s288 + $0xb8] sm:$0xff]
      %v708 = vld [vmem:[%s288 + $0xc0] sm:$0xff]
      %v709 = vld [vmem:[%s288 + $0xc8] sm:$0xff]
      %v710 = vld [vmem:[%s288 + $0xd0] sm:$0xff]
      %v711 = vld [vmem:[%s288 + $0xd8] sm:$0xff]
      %v712 = vld [vmem:[%s288 + $0xe0] sm:$0xff]
      %v713 = vld [vmem:[%s288 + $0xe8] sm:$0xff]
      %v714 = vld [vmem:[%s288 + $0xf0] sm:$0xff]
      %v715 = vld [vmem:[%s288 + $0xf8] sm:$0xff]
      %v716 = vld [vmem:[%s288 + $0x100] sm:$0xff]
      %v717 = vld [vmem:[%s288 + $0x108] sm:$0xff]
      %v718 = vld [vmem:[%s288 + $0x110] sm:$0xff]
      %v719 = vld [vmem:[%s288 + $0x118] sm:$0xff]
      %v720 = vld [vmem:[%s288 + $0x120] sm:$0xff]
      %v721 = vld [vmem:[%s288 + $0x128] sm:$0xff]
      %v722 = vld [vmem:[%s288 + $0x130] sm:$0xff]
      %v723 = vld [vmem:[%s288 + $0x138] sm:$0xff]
      %v724 = vld [vmem:[%s288 + $0x140] sm:$0xff]
      %v725 = vld [vmem:[%s288 + $0x148] sm:$0xff]
      %v726 = vld [vmem:[%s288 + $0x150] sm:$0xff]
      %v727 = vld [vmem:[%s288 + $0x158] sm:$0xff]
      %v728 = vld [vmem:[%s288 + $0x160] sm:$0xff]
      %v729 = vld [vmem:[%s288 + $0x168] sm:$0xff]
      %v730 = vld [vmem:[%s288 + $0x170] sm:$0xff]
      %v731 = vld [vmem:[%s288 + $0x178] sm:$0xff]
      %v732 = vld [vmem:[%s288 + $0x180] sm:$0xff]
      %v733 = vld [vmem:[%s288 + $0x188] sm:$0xff]
      %v734 = vld [vmem:[%s288 + $0x190] sm:$0xff]
      %v735 = vld [vmem:[%s288 + $0x198] sm:$0xff]
      %v736 = vld [vmem:[%s288 + $0x1a0] sm:$0xff]
      %v737 = vld [vmem:[%s288 + $0x1a8] sm:$0xff]
      %v738 = vld [vmem:[%s288 + $0x1b0] sm:$0xff]
      %v739 = vld [vmem:[%s288 + $0x1b8] sm:$0xff]
      %v740 = vld [vmem:[%s288 + $0x1c0] sm:$0xff]
      %v741 = vld [vmem:[%s288 + $0x1c8] sm:$0xff]
      %v742 = vld [vmem:[%s288 + $0x1d0] sm:$0xff]
      %v743 = vld [vmem:[%s288 + $0x1d8] sm:$0xff]
      %v744 = vld [vmem:[%s288 + $0x1e0] sm:$0xff]
      %v745 = vld [vmem:[%s288 + $0x1e8] sm:$0xff]
      %v746 = vld [vmem:[%s288 + $0x1f0] sm:$0xff]
      %v747 = vld [vmem:[%s288 + $0x1f8] sm:$0xff]
      %v748 = vadd.f32 %v620, %v684
      %v749 = vadd.f32 %v621, %v685
      %v750 = vadd.f32 %v622, %v686
      %v751 = vadd.f32 %v623, %v687
      %v752 = vadd.f32 %v624, %v688
      %v753 = vadd.f32 %v625, %v689
      %v754 = vadd.f32 %v626, %v690
      %v755 = vadd.f32 %v627, %v691
      %v756 = vadd.f32 %v628, %v692
      %v757 = vadd.f32 %v629, %v693
      %v758 = vadd.f32 %v630, %v694
      %v759 = vadd.f32 %v631, %v695
      %v760 = vadd.f32 %v632, %v696
      %v761 = vadd.f32 %v633, %v697
      %v762 = vadd.f32 %v634, %v698
      %v763 = vadd.f32 %v635, %v699
      %v764 = vadd.f32 %v636, %v700
      %v765 = vadd.f32 %v637, %v701
      %v766 = vadd.f32 %v638, %v702
      %v767 = vadd.f32 %v639, %v703
      %v768 = vadd.f32 %v640, %v704
      %v769 = vadd.f32 %v641, %v705
      %v770 = vadd.f32 %v642, %v706
      %v771 = vadd.f32 %v643, %v707
      %v772 = vadd.f32 %v644, %v708
      %v773 = vadd.f32 %v645, %v709
      %v774 = vadd.f32 %v646, %v710
      %v775 = vadd.f32 %v647, %v711
      %v776 = vadd.f32 %v648, %v712
      %v777 = vadd.f32 %v649, %v713
      %v778 = vadd.f32 %v650, %v714
      %v779 = vadd.f32 %v651, %v715
      %v780 = vadd.f32 %v652, %v716
      %v781 = vadd.f32 %v653, %v717
      %v782 = vadd.f32 %v654, %v718
      %v783 = vadd.f32 %v655, %v719
      %v784 = vadd.f32 %v656, %v720
      %v785 = vadd.f32 %v657, %v721
      %v786 = vadd.f32 %v658, %v722
      %v787 = vadd.f32 %v659, %v723
      %v788 = vadd.f32 %v660, %v724
      %v789 = vadd.f32 %v661, %v725
      %v790 = vadd.f32 %v662, %v726
      %v791 = vadd.f32 %v663, %v727
      %v792 = vadd.f32 %v664, %v728
      %v793 = vadd.f32 %v665, %v729
      %v794 = vadd.f32 %v666, %v730
      %v795 = vadd.f32 %v667, %v731
      %v796 = vadd.f32 %v668, %v732
      %v797 = vadd.f32 %v669, %v733
      %v798 = vadd.f32 %v670, %v734
      %v799 = vadd.f32 %v671, %v735
      %v800 = vadd.f32 %v672, %v736
      %v801 = vadd.f32 %v673, %v737
      %v802 = vadd.f32 %v674, %v738
      %v803 = vadd.f32 %v675, %v739
      %v804 = vadd.f32 %v676, %v740
      %v805 = vadd.f32 %v677, %v741
      %v806 = vadd.f32 %v678, %v742
      %v807 = vadd.f32 %v679, %v743
      %v808 = vadd.f32 %v680, %v744
      %v809 = vadd.f32 %v681, %v745
      %v810 = vadd.f32 %v682, %v746
      %v811 = vadd.f32 %v683, %v747
      %v812 = vmax.f32 %v748, 0.0
      %v813 = vmax.f32 %v749, 0.0
      %v814 = vmax.f32 %v750, 0.0
      %v815 = vmax.f32 %v751, 0.0
      %v816 = vmax.f32 %v752, 0.0
      %v817 = vmax.f32 %v753, 0.0
      %v818 = vmax.f32 %v754, 0.0
      %v819 = vmax.f32 %v755, 0.0
      %v820 = vmax.f32 %v756, 0.0
      %v821 = vmax.f32 %v757, 0.0
      %v822 = vmax.f32 %v758, 0.0
      %v823 = vmax.f32 %v759, 0.0
      %v824 = vmax.f32 %v760, 0.0
      %v825 = vmax.f32 %v761, 0.0
      %v826 = vmax.f32 %v762, 0.0
      %v827 = vmax.f32 %v763, 0.0
      %v828 = vmax.f32 %v764, 0.0
      %v829 = vmax.f32 %v765, 0.0
      %v830 = vmax.f32 %v766, 0.0
      %v831 = vmax.f32 %v767, 0.0
      %v832 = vmax.f32 %v768, 0.0
      %v833 = vmax.f32 %v769, 0.0
      %v834 = vmax.f32 %v770, 0.0
      %v835 = vmax.f32 %v771, 0.0
      %v836 = vmax.f32 %v772, 0.0
      %v837 = vmax.f32 %v773, 0.0
      %v838 = vmax.f32 %v774, 0.0
      %v839 = vmax.f32 %v775, 0.0
      %v840 = vmax.f32 %v776, 0.0
      %v841 = vmax.f32 %v777, 0.0
      %v842 = vmax.f32 %v778, 0.0
      %v843 = vmax.f32 %v779, 0.0
      %v844 = vmax.f32 %v780, 0.0
      %v845 = vmax.f32 %v781, 0.0
      %v846 = vmax.f32 %v782, 0.0
      %v847 = vmax.f32 %v783, 0.0
      %v848 = vmax.f32 %v784, 0.0
      %v849 = vmax.f32 %v785, 0.0
      %v850 = vmax.f32 %v786, 0.0
      %v851 = vmax.f32 %v787, 0.0
      %v852 = vmax.f32 %v788, 0.0
      %v853 = vmax.f32 %v789, 0.0
      %v854 = vmax.f32 %v790, 0.0
      %v855 = vmax.f32 %v791, 0.0
      %v856 = vmax.f32 %v792, 0.0
      %v857 = vmax.f32 %v793, 0.0
      %v858 = vmax.f32 %v794, 0.0
      %v859 = vmax.f32 %v795, 0.0
      %v860 = vmax.f32 %v796, 0.0
      %v861 = vmax.f32 %v797, 0.0
      %v862 = vmax.f32 %v798, 0.0
      %v863 = vmax.f32 %v799, 0.0
      %v864 = vmax.f32 %v800, 0.0
      %v865 = vmax.f32 %v801, 0.0
      %v866 = vmax.f32 %v802, 0.0
      %v867 = vmax.f32 %v803, 0.0
      %v868 = vmax.f32 %v804, 0.0
      %v869 = vmax.f32 %v805, 0.0
      %v870 = vmax.f32 %v806, 0.0
      %v871 = vmax.f32 %v807, 0.0
      %v872 = vmax.f32 %v808, 0.0
      %v873 = vmax.f32 %v809, 0.0
      %v874 = vmax.f32 %v810, 0.0
      %v875 = vmax.f32 %v811, 0.0
      %v876 = vld [vmem:[%s4] sm:$0xff]
      %v877 = vld [vmem:[%s4 + $0x8] sm:$0xff]
      %v878 = vld [vmem:[%s4 + $0x10] sm:$0xff]
      %v879 = vld [vmem:[%s4 + $0x18] sm:$0xff]
      %v880 = vld [vmem:[%s4 + $0x20] sm:$0xff]
      %v881 = vld [vmem:[%s4 + $0x28] sm:$0xff]
      %v882 = vld [vmem:[%s4 + $0x30] sm:$0xff]
      %v883 = vld [vmem:[%s4 + $0x38] sm:$0xff]
      %v884 = vld [vmem:[%s4 + $0x40] sm:$0xff]
      %v885 = vld [vmem:[%s4 + $0x48] sm:$0xff]
      %v886 = vld [vmem:[%s4 + $0x50] sm:$0xff]
      %v887 = vld [vmem:[%s4 + $0x58] sm:$0xff]
      %v888 = vld [vmem:[%s4 + $0x60] sm:$0xff]
      %v889 = vld [vmem:[%s4 + $0x68] sm:$0xff]
      %v890 = vld [vmem:[%s4 + $0x70] sm:$0xff]
      %v891 = vld [vmem:[%s4 + $0x78] sm:$0xff]
      %v892 = vld [vmem:[%s4 + $0x80] sm:$0xff]
      %v893 = vld [vmem:[%s4 + $0x88] sm:$0xff]
      %v894 = vld [vmem:[%s4 + $0x90] sm:$0xff]
      %v895 = vld [vmem:[%s4 + $0x98] sm:$0xff]
      %v896 = vld [vmem:[%s4 + $0xa0] sm:$0xff]
      %v897 = vld [vmem:[%s4 + $0xa8] sm:$0xff]
      %v898 = vld [vmem:[%s4 + $0xb0] sm:$0xff]
      %v899 = vld [vmem:[%s4 + $0xb8] sm:$0xff]
      %v900 = vld [vmem:[%s4 + $0xc0] sm:$0xff]
      %v901 = vld [vmem:[%s4 + $0xc8] sm:$0xff]
      %v902 = vld [vmem:[%s4 + $0xd0] sm:$0xff]
      %v903 = vld [vmem:[%s4 + $0xd8] sm:$0xff]
      %v904 = vld [vmem:[%s4 + $0xe0] sm:$0xff]
      %v905 = vld [vmem:[%s4 + $0xe8] sm:$0xff]
      %v906 = vld [vmem:[%s4 + $0xf0] sm:$0xff]
      %v907 = vld [vmem:[%s4 + $0xf8] sm:$0xff]
      %908 = vmatprep.subr.mxu0 %v813
      %909 = vmatpush1.msra.mxu0 %v812
      %910 = vmatprep.subr.mxu0 %v817
      %911 = vmatpush1.msra.mxu0 %v816
      %912 = vmatprep.subr.mxu0 %v821
      %913 = vmatpush1.msra.mxu0 %v820
      %914 = vmatprep.subr.mxu0 %v825
      %915 = vmatpush1.msra.mxu0 %v824
      %916 = vmatprep.subr.mxu0 %v829
      %917 = vmatpush1.msra.mxu0 %v828
      %918 = vmatprep.subr.mxu0 %v833
      %919 = vmatpush1.msra.mxu0 %v832
      %920 = vmatprep.subr.mxu0 %v837
      %921 = vmatpush1.msra.mxu0 %v836
      %922 = vmatprep.subr.mxu0 %v841
      %923 = vmatpush1.msra.mxu0 %v840
      %924 = vmatprep.subr.mxu0 %v845
      %925 = vmatpush1.msra.mxu0 %v844
      %926 = vmatprep.subr.mxu0 %v849
      %927 = vmatpush1.msra.mxu0 %v848
      %928 = vmatprep.subr.mxu0 %v853
      %929 = vmatpush1.msra.mxu0 %v852
      %930 = vmatprep.subr.mxu0 %v857
      %931 = vmatpush1.msra.mxu0 %v856
      %932 = vmatprep.subr.mxu0 %v861
      %933 = vmatpush1.msra.mxu0 %v860
      %934 = vmatprep.subr.mxu0 %v865
      %935 = vmatpush1.msra.mxu0 %v864
      %936 = vmatprep.subr.mxu0 %v869
      %937 = vmatpush1.msra.mxu0 %v868
      %938 = vmatprep.subr.mxu0 %v873
      %939 = vmatpush1.msra.mxu0 %v872
      %940 = vmatprep.subr.mxu0 0.0
      %941 = vmatpush1.msra.mxu0 0.0
      %942 = vmatprep.subr.mxu0 0.0
      %943 = vmatpush1.msra.mxu0 0.0
      %944 = vmatprep.subr.mxu0 0.0
      %945 = vmatpush1.msra.mxu0 0.0
      %946 = vmatprep.subr.mxu0 0.0
      %947 = vmatpush1.msra.mxu0 0.0
      %948 = vmatprep.subr.mxu0 0.0
      %949 = vmatpush1.msra.mxu0 0.0
      %950 = vmatprep.subr.mxu0 0.0
      %951 = vmatpush1.msra.mxu0 0.0
      %952 = vmatprep.subr.mxu0 0.0
      %953 = vmatpush1.msra.mxu0 0.0
      %954 = vmatprep.subr.mxu0 0.0
      %955 = vmatpush1.msra.mxu0 0.0
      %956 = vmatprep.subr.mxu0 0.0
      %957 = vmatpush1.msra.mxu0 0.0
      %958 = vmatprep.subr.mxu0 0.0
      %959 = vmatpush1.msra.mxu0 0.0
      %960 = vmatprep.subr.mxu0 0.0
      %961 = vmatpush1.msra.mxu0 0.0
      %962 = vmatprep.subr.mxu0 0.0
      %963 = vmatpush1.msra.mxu0 0.0
      %964 = vmatprep.subr.mxu0 0.0
      %965 = vmatpush1.msra.mxu0 0.0
      %966 = vmatprep.subr.mxu0 0.0
      %967 = vmatpush1.msra.mxu0 0.0
      %968 = vmatprep.subr.mxu0 0.0
      %969 = vmatpush1.msra.mxu0 0.0
      %970 = vmatprep.subr.mxu0 0.0
      %971 = vmatpush1.msra.mxu0 0.0
      %972 = vmatprep.mubr.f32.mxu0 0.0
      %973 = vmatmul.mubr.f32.gmra.mrb[0].mxu0 %v876
      %v974 = vpop.f32.mrb[0].mxu0
      %v975 = vadd.f32 0.0, %v974
      %v976 = vpop.f32.mrb[0].mxu0
      %v977 = vadd.f32 0.0, %v976
      %978 = vmatprep.mubr.f32.mxu0 0.0
      %979 = vmatmul.mubr.f32.gmra.mrb[0].mxu0 %v877
      %v980 = vpop.f32.mrb[0].mxu0
      %v981 = vadd.f32 0.0, %v980
      %v982 = vpop.f32.mrb[0].mxu0
      %v983 = vadd.f32 0.0, %v982
      %984 = vmatprep.mubr.f32.mxu0 0.0
      %985 = vmatmul.mubr.f32.gmra.mrb[0].mxu0 %v878
      %v986 = vpop.f32.mrb[0].mxu0
      %v987 = vadd.f32 0.0, %v986
      %v988 = vpop.f32.mrb[0].mxu0
      %v989 = vadd.f32 0.0, %v988
      %990 = vmatprep.mubr.f32.mxu0 0.0
      %991 = vmatmul.mubr.f32.gmra.mrb[0].mxu0 %v879
      %v992 = vpop.f32.mrb[0].mxu0
      %v993 = vadd.f32 0.0, %v992
      %v994 = vpop.f32.mrb[0].mxu0
      %v995 = vadd.f32 0.0, %v994
      %996 = vmatprep.mubr.f32.mxu0 0.0
      %997 = vmatmul.mubr.f32.gmra.mrb[0].mxu0 %v880
      %v998 = vpop.f32.mrb[0].mxu0
      %v999 = vadd.f32 0.0, %v998
      %v1000 = vpop.f32.mrb[0].mxu0
      %v1001 = vadd.f32 0.0, %v1000
      %1002 = vmatprep.mubr.f32.mxu0 0.0
      %1003 = vmatmul.mubr.f32.gmra.mrb[0].mxu0 %v881
      %v1004 = vpop.f32.mrb[0].mxu0
      %v1005 = vadd.f32 0.0, %v1004
      %v1006 = vpop.f32.mrb[0].mxu0
      %v1007 = vadd.f32 0.0, %v1006
      %1008 = vmatprep.mubr.f32.mxu0 0.0
      %1009 = vmatmul.mubr.f32.gmra.mrb[0].mxu0 %v882
      %v1010 = vpop.f32.mrb[0].mxu0
      %v1011 = vadd.f32 0.0, %v1010
      %v1012 = vpop.f32.mrb[0].mxu0
      %v1013 = vadd.f32 0.0, %v1012
      %1014 = vmatprep.mubr.f32.mxu0 0.0
      %1015 = vmatmul.mubr.f32.gmra.mrb[0].mxu0 %v883
      %v1016 = vpop.f32.mrb[0].mxu0
      %v1017 = vadd.f32 0.0, %v1016
      %v1018 = vpop.f32.mrb[0].mxu0
      %v1019 = vadd.f32 0.0, %v1018
      %1020 = vmatprep.mubr.f32.mxu0 0.0
      %1021 = vmatmul.mubr.f32.gmra.mrb[0].mxu0 %v884
      %v1022 = vpop.f32.mrb[0].mxu0
      %v1023 = vadd.f32 0.0, %v1022
      %v1024 = vpop.f32.mrb[0].mxu0
      %v1025 = vadd.f32 0.0, %v1024
      %1026 = vmatprep.mubr.f32.mxu0 0.0
      %1027 = vmatmul.mubr.f32.gmra.mrb[0].mxu0 %v885
      %v1028 = vpop.f32.mrb[0].mxu0
      %v1029 = vadd.f32 0.0, %v1028
      %v1030 = vpop.f32.mrb[0].mxu0
      %v1031 = vadd.f32 0.0, %v1030
      %1032 = vmatprep.mubr.f32.mxu0 0.0
      %1033 = vmatmul.mubr.f32.gmra.mrb[0].mxu0 %v886
      %v1034 = vpop.f32.mrb[0].mxu0
      %v1035 = vadd.f32 0.0, %v1034
      %v1036 = vpop.f32.mrb[0].mxu0
      %v1037 = vadd.f32 0.0, %v1036
      %1038 = vmatprep.mubr.f32.mxu0 0.0
      %1039 = vmatmul.mubr.f32.gmra.mrb[0].mxu0 %v887
      %v1040 = vpop.f32.mrb[0].mxu0
      %v1041 = vadd.f32 0.0, %v1040
      %v1042 = vpop.f32.mrb[0].mxu0
      %v1043 = vadd.f32 0.0, %v1042
      %1044 = vmatprep.mubr.f32.mxu0 0.0
      %1045 = vmatmul.mubr.f32.gmra.mrb[0].mxu0 %v888
      %v1046 = vpop.f32.mrb[0].mxu0
      %v1047 = vadd.f32 0.0, %v1046
      %v1048 = vpop.f32.mrb[0].mxu0
      %v1049 = vadd.f32 0.0, %v1048
      %1050 = vmatprep.mubr.f32.mxu0 0.0
      %1051 = vmatmul.mubr.f32.gmra.mrb[0].mxu0 %v889
      %v1052 = vpop.f32.mrb[0].mxu0
      %v1053 = vadd.f32 0.0, %v1052
      %v1054 = vpop.f32.mrb[0].mxu0
      %v1055 = vadd.f32 0.0, %v1054
      %1056 = vmatprep.mubr.f32.mxu0 0.0
      %1057 = vmatmul.mubr.f32.gmra.mrb[0].mxu0 %v890
      %v1058 = vpop.f32.mrb[0].mxu0
      %v1059 = vadd.f32 0.0, %v1058
      %v1060 = vpop.f32.mrb[0].mxu0
      %v1061 = vadd.f32 0.0, %v1060
      %1062 = vmatprep.mubr.f32.mxu0 0.0
      %1063 = vmatmul.mubr.f32.gmra.mrb[0].mxu0 %v891
      %v1064 = vpop.f32.mrb[0].mxu0
      %v1065 = vadd.f32 0.0, %v1064
      %v1066 = vpop.f32.mrb[0].mxu0
      %v1067 = vadd.f32 0.0, %v1066
      %1068 = vmatprep.mubr.f32.mxu0 0.0
      %1069 = vmatmul.mubr.f32.gmra.mrb[0].mxu0 %v892
      %v1070 = vpop.f32.mrb[0].mxu0
      %v1071 = vadd.f32 0.0, %v1070
      %v1072 = vpop.f32.mrb[0].mxu0
      %v1073 = vadd.f32 0.0, %v1072
      %1074 = vmatprep.mubr.f32.mxu0 0.0
      %1075 = vmatmul.mubr.f32.gmra.mrb[0].mxu0 %v893
      %v1076 = vpop.f32.mrb[0].mxu0
      %v1077 = vadd.f32 0.0, %v1076
      %v1078 = vpop.f32.mrb[0].mxu0
      %v1079 = vadd.f32 0.0, %v1078
      %1080 = vmatprep.mubr.f32.mxu0 0.0
      %1081 = vmatmul.mubr.f32.gmra.mrb[0].mxu0 %v894
      %v1082 = vpop.f32.mrb[0].mxu0
      %v1083 = vadd.f32 0.0, %v1082
      %v1084 = vpop.f32.mrb[0].mxu0
      %v1085 = vadd.f32 0.0, %v1084
      %1086 = vmatprep.mubr.f32.mxu0 0.0
      %1087 = vmatmul.mubr.f32.gmra.mrb[0].mxu0 %v895
      %v1088 = vpop.f32.mrb[0].mxu0
      %v1089 = vadd.f32 0.0, %v1088
      %v1090 = vpop.f32.mrb[0].mxu0
      %v1091 = vadd.f32 0.0, %v1090
      %1092 = vmatprep.mubr.f32.mxu0 0.0
      %1093 = vmatmul.mubr.f32.gmra.mrb[0].mxu0 %v896
      %v1094 = vpop.f32.mrb[0].mxu0
      %v1095 = vadd.f32 0.0, %v1094
      %v1096 = vpop.f32.mrb[0].mxu0
      %v1097 = vadd.f32 0.0, %v1096
      %1098 = vmatprep.mubr.f32.mxu0 0.0
      %1099 = vmatmul.mubr.f32.gmra.mrb[0].mxu0 %v897
      %v1100 = vpop.f32.mrb[0].mxu0
      %v1101 = vadd.f32 0.0, %v1100
      %v1102 = vpop.f32.mrb[0].mxu0
      %v1103 = vadd.f32 0.0, %v1102
      %1104 = vmatprep.mubr.f32.mxu0 0.0
      %1105 = vmatmul.mubr.f32.gmra.mrb[0].mxu0 %v898
      %v1106 = vpop.f32.mrb[0].mxu0
      %v1107 = vadd.f32 0.0, %v1106
      %v1108 = vpop.f32.mrb[0].mxu0
      %v1109 = vadd.f32 0.0, %v1108
      %1110 = vmatprep.mubr.f32.mxu0 0.0
      %1111 = vmatmul.mubr.f32.gmra.mrb[0].mxu0 %v899
      %v1112 = vpop.f32.mrb[0].mxu0
      %v1113 = vadd.f32 0.0, %v1112
      %v1114 = vpop.f32.mrb[0].mxu0
      %v1115 = vadd.f32 0.0, %v1114
      %1116 = vmatprep.mubr.f32.mxu0 0.0
      %1117 = vmatmul.mubr.f32.gmra.mrb[0].mxu0 %v900
      %v1118 = vpop.f32.mrb[0].mxu0
      %v1119 = vadd.f32 0.0, %v1118
      %v1120 = vpop.f32.mrb[0].mxu0
      %v1121 = vadd.f32 0.0, %v1120
      %1122 = vmatprep.mubr.f32.mxu0 0.0
      %1123 = vmatmul.mubr.f32.gmra.mrb[0].mxu0 %v901
      %v1124 = vpop.f32.mrb[0].mxu0
      %v1125 = vadd.f32 0.0, %v1124
      %v1126 = vpop.f32.mrb[0].mxu0
      %v1127 = vadd.f32 0.0, %v1126
      %1128 = vmatprep.mubr.f32.mxu0 0.0
      %1129 = vmatmul.mubr.f32.gmra.mrb[0].mxu0 %v902
      %v1130 = vpop.f32.mrb[0].mxu0
      %v1131 = vadd.f32 0.0, %v1130
      %v1132 = vpop.f32.mrb[0].mxu0
      %v1133 = vadd.f32 0.0, %v1132
      %1134 = vmatprep.mubr.f32.mxu0 0.0
      %1135 = vmatmul.mubr.f32.gmra.mrb[0].mxu0 %v903
      %v1136 = vpop.f32.mrb[0].mxu0
      %v1137 = vadd.f32 0.0, %v1136
      %v1138 = vpop.f32.mrb[0].mxu0
      %v1139 = vadd.f32 0.0, %v1138
      %1140 = vmatprep.mubr.f32.mxu0 0.0
      %1141 = vmatmul.mubr.f32.gmra.mrb[0].mxu0 %v904
      %v1142 = vpop.f32.mrb[0].mxu0
      %v1143 = vadd.f32 0.0, %v1142
      %v1144 = vpop.f32.mrb[0].mxu0
      %v1145 = vadd.f32 0.0, %v1144
      %1146 = vmatprep.mubr.f32.mxu0 0.0
      %1147 = vmatmul.mubr.f32.gmra.mrb[0].mxu0 %v905
      %v1148 = vpop.f32.mrb[0].mxu0
      %v1149 = vadd.f32 0.0, %v1148
      %v1150 = vpop.f32.mrb[0].mxu0
      %v1151 = vadd.f32 0.0, %v1150
      %1152 = vmatprep.mubr.f32.mxu0 0.0
      %1153 = vmatmul.mubr.f32.gmra.mrb[0].mxu0 %v906
      %v1154 = vpop.f32.mrb[0].mxu0
      %v1155 = vadd.f32 0.0, %v1154
      %v1156 = vpop.f32.mrb[0].mxu0
      %v1157 = vadd.f32 0.0, %v1156
      %1158 = vmatprep.mubr.f32.mxu0 0.0
      %1159 = vmatmul.mubr.f32.gmra.mrb[0].mxu0 %v907
      %v1160 = vpop.f32.mrb[0].mxu0
      %v1161 = vadd.f32 0.0, %v1160
      %v1162 = vpop.f32.mrb[0].mxu0
      %v1163 = vadd.f32 0.0, %v1162
      %1164 = vdwg.mxu0
      %1165 = vmatprep.subr.mxu0 %v815
      %1166 = vmatpush1.msra.mxu0 %v814
      %1167 = vmatprep.subr.mxu0 %v819
      %1168 = vmatpush1.msra.mxu0 %v818
      %1169 = vmatprep.subr.mxu0 %v823
      %1170 = vmatpush1.msra.mxu0 %v822
      %1171 = vmatprep.subr.mxu0 %v827
      %1172 = vmatpush1.msra.mxu0 %v826
      %1173 = vmatprep.subr.mxu0 %v831
      %1174 = vmatpush1.msra.mxu0 %v830
      %1175 = vmatprep.subr.mxu0 %v835
      %1176 = vmatpush1.msra.mxu0 %v834
      %1177 = vmatprep.subr.mxu0 %v839
      %1178 = vmatpush1.msra.mxu0 %v838
      %1179 = vmatprep.subr.mxu0 %v843
      %1180 = vmatpush1.msra.mxu0 %v842
      %1181 = vmatprep.subr.mxu0 %v847
      %1182 = vmatpush1.msra.mxu0 %v846
      %1183 = vmatprep.subr.mxu0 %v851
      %1184 = vmatpush1.msra.mxu0 %v850
      %1185 = vmatprep.subr.mxu0 %v855
      %1186 = vmatpush1.msra.mxu0 %v854
      %1187 = vmatprep.subr.mxu0 %v859
      %1188 = vmatpush1.msra.mxu0 %v858
      %1189 = vmatprep.subr.mxu0 %v863
      %1190 = vmatpush1.msra.mxu0 %v862
      %1191 = vmatprep.subr.mxu0 %v867
      %1192 = vmatpush1.msra.mxu0 %v866
      %1193 = vmatprep.subr.mxu0 %v871
      %1194 = vmatpush1.msra.mxu0 %v870
      %1195 = vmatprep.subr.mxu0 %v875
      %1196 = vmatpush1.msra.mxu0 %v874
      %1197 = vmatprep.subr.mxu0 0.0
      %1198 = vmatpush1.msra.mxu0 0.0
      %1199 = vmatprep.subr.mxu0 0.0
      %1200 = vmatpush1.msra.mxu0 0.0
      %1201 = vmatprep.subr.mxu0 0.0
      %1202 = vmatpush1.msra.mxu0 0.0
      %1203 = vmatprep.subr.mxu0 0.0
      %1204 = vmatpush1.msra.mxu0 0.0
      %1205 = vmatprep.subr.mxu0 0.0
      %1206 = vmatpush1.msra.mxu0 0.0
      %1207 = vmatprep.subr.mxu0 0.0
      %1208 = vmatpush1.msra.mxu0 0.0
      %1209 = vmatprep.subr.mxu0 0.0
      %1210 = vmatpush1.msra.mxu0 0.0
      %1211 = vmatprep.subr.mxu0 0.0
      %1212 = vmatpush1.msra.mxu0 0.0
      %1213 = vmatprep.subr.mxu0 0.0
      %1214 = vmatpush1.msra.mxu0 0.0
      %1215 = vmatprep.subr.mxu0 0.0
      %1216 = vmatpush1.msra.mxu0 0.0
      %1217 = vmatprep.subr.mxu0 0.0
      %1218 = vmatpush1.msra.mxu0 0.0
      %1219 = vmatprep.subr.mxu0 0.0
      %1220 = vmatpush1.msra.mxu0 0.0
      %1221 = vmatprep.subr.mxu0 0.0
      %1222 = vmatpush1.msra.mxu0 0.0
      %1223 = vmatprep.subr.mxu0 0.0
      %1224 = vmatpush1.msra.mxu0 0.0
      %1225 = vmatprep.subr.mxu0 0.0
      %1226 = vmatpush1.msra.mxu0 0.0
      %1227 = vmatprep.subr.mxu0 0.0
      %1228 = vmatpush1.msra.mxu0 0.0
      %1229 = vmatprep.mubr.f32.mxu0 0.0
      %1230 = vmatmul.mubr.f32.gmra.mrb[0].mxu0 %v876
      %v1231 = vpop.f32.mrb[0].mxu0
      %v1232 = vadd.f32 0.0, %v1231
      %v1233 = vpop.f32.mrb[0].mxu0
      %v1234 = vadd.f32 0.0, %v1233
      %1235 = vmatprep.mubr.f32.mxu0 0.0
      %1236 = vmatmul.mubr.f32.gmra.mrb[0].mxu0 %v877
      %v1237 = vpop.f32.mrb[0].mxu0
      %v1238 = vadd.f32 0.0, %v1237
      %v1239 = vpop.f32.mrb[0].mxu0
      %v1240 = vadd.f32 0.0, %v1239
      %1241 = vmatprep.mubr.f32.mxu0 0.0
      %1242 = vmatmul.mubr.f32.gmra.mrb[0].mxu0 %v878
      %v1243 = vpop.f32.mrb[0].mxu0
      %v1244 = vadd.f32 0.0, %v1243
      %v1245 = vpop.f32.mrb[0].mxu0
      %v1246 = vadd.f32 0.0, %v1245
      %1247 = vmatprep.mubr.f32.mxu0 0.0
      %1248 = vmatmul.mubr.f32.gmra.mrb[0].mxu0 %v879
      %v1249 = vpop.f32.mrb[0].mxu0
      %v1250 = vadd.f32 0.0, %v1249
      %v1251 = vpop.f32.mrb[0].mxu0
      %v1252 = vadd.f32 0.0, %v1251
      %1253 = vmatprep.mubr.f32.mxu0 0.0
      %1254 = vmatmul.mubr.f32.gmra.mrb[0].mxu0 %v880
      %v1255 = vpop.f32.mrb[0].mxu0
      %v1256 = vadd.f32 0.0, %v1255
      %v1257 = vpop.f32.mrb[0].mxu0
      %v1258 = vadd.f32 0.0, %v1257
      %1259 = vmatprep.mubr.f32.mxu0 0.0
      %1260 = vmatmul.mubr.f32.gmra.mrb[0].mxu0 %v881
      %v1261 = vpop.f32.mrb[0].mxu0
      %v1262 = vadd.f32 0.0, %v1261
      %v1263 = vpop.f32.mrb[0].mxu0
      %v1264 = vadd.f32 0.0, %v1263
      %1265 = vmatprep.mubr.f32.mxu0 0.0
      %1266 = vmatmul.mubr.f32.gmra.mrb[0].mxu0 %v882
      %v1267 = vpop.f32.mrb[0].mxu0
      %v1268 = vadd.f32 0.0, %v1267
      %v1269 = vpop.f32.mrb[0].mxu0
      %v1270 = vadd.f32 0.0, %v1269
      %1271 = vmatprep.mubr.f32.mxu0 0.0
      %1272 = vmatmul.mubr.f32.gmra.mrb[0].mxu0 %v883
      %v1273 = vpop.f32.mrb[0].mxu0
      %v1274 = vadd.f32 0.0, %v1273
      %v1275 = vpop.f32.mrb[0].mxu0
      %v1276 = vadd.f32 0.0, %v1275
      %1277 = vmatprep.mubr.f32.mxu0 0.0
      %1278 = vmatmul.mubr.f32.gmra.mrb[0].mxu0 %v884
      %v1279 = vpop.f32.mrb[0].mxu0
      %v1280 = vadd.f32 0.0, %v1279
      %v1281 = vpop.f32.mrb[0].mxu0
      %v1282 = vadd.f32 0.0, %v1281
      %1283 = vmatprep.mubr.f32.mxu0 0.0
      %1284 = vmatmul.mubr.f32.gmra.mrb[0].mxu0 %v885
      %v1285 = vpop.f32.mrb[0].mxu0
      %v1286 = vadd.f32 0.0, %v1285
      %v1287 = vpop.f32.mrb[0].mxu0
      %v1288 = vadd.f32 0.0, %v1287
      %1289 = vmatprep.mubr.f32.mxu0 0.0
      %1290 = vmatmul.mubr.f32.gmra.mrb[0].mxu0 %v886
      %v1291 = vpop.f32.mrb[0].mxu0
      %v1292 = vadd.f32 0.0, %v1291
      %v1293 = vpop.f32.mrb[0].mxu0
      %v1294 = vadd.f32 0.0, %v1293
      %1295 = vmatprep.mubr.f32.mxu0 0.0
      %1296 = vmatmul.mubr.f32.gmra.mrb[0].mxu0 %v887
      %v1297 = vpop.f32.mrb[0].mxu0
      %v1298 = vadd.f32 0.0, %v1297
      %v1299 = vpop.f32.mrb[0].mxu0
      %v1300 = vadd.f32 0.0, %v1299
      %1301 = vmatprep.mubr.f32.mxu0 0.0
      %1302 = vmatmul.mubr.f32.gmra.mrb[0].mxu0 %v888
      %v1303 = vpop.f32.mrb[0].mxu0
      %v1304 = vadd.f32 0.0, %v1303
      %v1305 = vpop.f32.mrb[0].mxu0
      %v1306 = vadd.f32 0.0, %v1305
      %1307 = vmatprep.mubr.f32.mxu0 0.0
      %1308 = vmatmul.mubr.f32.gmra.mrb[0].mxu0 %v889
      %v1309 = vpop.f32.mrb[0].mxu0
      %v1310 = vadd.f32 0.0, %v1309
      %v1311 = vpop.f32.mrb[0].mxu0
      %v1312 = vadd.f32 0.0, %v1311
      %1313 = vmatprep.mubr.f32.mxu0 0.0
      %1314 = vmatmul.mubr.f32.gmra.mrb[0].mxu0 %v890
      %v1315 = vpop.f32.mrb[0].mxu0
      %v1316 = vadd.f32 0.0, %v1315
      %v1317 = vpop.f32.mrb[0].mxu0
      %v1318 = vadd.f32 0.0, %v1317
      %1319 = vmatprep.mubr.f32.mxu0 0.0
      %1320 = vmatmul.mubr.f32.gmra.mrb[0].mxu0 %v891
      %v1321 = vpop.f32.mrb[0].mxu0
      %v1322 = vadd.f32 0.0, %v1321
      %v1323 = vpop.f32.mrb[0].mxu0
      %v1324 = vadd.f32 0.0, %v1323
      %1325 = vmatprep.mubr.f32.mxu0 0.0
      %1326 = vmatmul.mubr.f32.gmra.mrb[0].mxu0 %v892
      %v1327 = vpop.f32.mrb[0].mxu0
      %v1328 = vadd.f32 0.0, %v1327
      %v1329 = vpop.f32.mrb[0].mxu0
      %v1330 = vadd.f32 0.0, %v1329
      %1331 = vmatprep.mubr.f32.mxu0 0.0
      %1332 = vmatmul.mubr.f32.gmra.mrb[0].mxu0 %v893
      %v1333 = vpop.f32.mrb[0].mxu0
      %v1334 = vadd.f32 0.0, %v1333
      %v1335 = vpop.f32.mrb[0].mxu0
      %v1336 = vadd.f32 0.0, %v1335
      %1337 = vmatprep.mubr.f32.mxu0 0.0
      %1338 = vmatmul.mubr.f32.gmra.mrb[0].mxu0 %v894
      %v1339 = vpop.f32.mrb[0].mxu0
      %v1340 = vadd.f32 0.0, %v1339
      %v1341 = vpop.f32.mrb[0].mxu0
      %v1342 = vadd.f32 0.0, %v1341
      %1343 = vmatprep.mubr.f32.mxu0 0.0
      %1344 = vmatmul.mubr.f32.gmra.mrb[0].mxu0 %v895
      %v1345 = vpop.f32.mrb[0].mxu0
      %v1346 = vadd.f32 0.0, %v1345
      %v1347 = vpop.f32.mrb[0].mxu0
      %v1348 = vadd.f32 0.0, %v1347
      %1349 = vmatprep.mubr.f32.mxu0 0.0
      %1350 = vmatmul.mubr.f32.gmra.mrb[0].mxu0 %v896
      %v1351 = vpop.f32.mrb[0].mxu0
      %v1352 = vadd.f32 0.0, %v1351
      %v1353 = vpop.f32.mrb[0].mxu0
      %v1354 = vadd.f32 0.0, %v1353
      %1355 = vmatprep.mubr.f32.mxu0 0.0
      %1356 = vmatmul.mubr.f32.gmra.mrb[0].mxu0 %v897
      %v1357 = vpop.f32.mrb[0].mxu0
      %v1358 = vadd.f32 0.0, %v1357
      %v1359 = vpop.f32.mrb[0].mxu0
      %v1360 = vadd.f32 0.0, %v1359
      %1361 = vmatprep.mubr.f32.mxu0 0.0
      %1362 = vmatmul.mubr.f32.gmra.mrb[0].mxu0 %v898
      %v1363 = vpop.f32.mrb[0].mxu0
      %v1364 = vadd.f32 0.0, %v1363
      %v1365 = vpop.f32.mrb[0].mxu0
      %v1366 = vadd.f32 0.0, %v1365
      %1367 = vmatprep.mubr.f32.mxu0 0.0
      %1368 = vmatmul.mubr.f32.gmra.mrb[0].mxu0 %v899
      %v1369 = vpop.f32.mrb[0].mxu0
      %v1370 = vadd.f32 0.0, %v1369
      %v1371 = vpop.f32.mrb[0].mxu0
      %v1372 = vadd.f32 0.0, %v1371
      %1373 = vmatprep.mubr.f32.mxu0 0.0
      %1374 = vmatmul.mubr.f32.gmra.mrb[0].mxu0 %v900
      %v1375 = vpop.f32.mrb[0].mxu0
      %v1376 = vadd.f32 0.0, %v1375
      %v1377 = vpop.f32.mrb[0].mxu0
      %v1378 = vadd.f32 0.0, %v1377
      %1379 = vmatprep.mubr.f32.mxu0 0.0
      %1380 = vmatmul.mubr.f32.gmra.mrb[0].mxu0 %v901
      %v1381 = vpop.f32.mrb[0].mxu0
      %v1382 = vadd.f32 0.0, %v1381
      %v1383 = vpop.f32.mrb[0].mxu0
      %v1384 = vadd.f32 0.0, %v1383
      %1385 = vmatprep.mubr.f32.mxu0 0.0
      %1386 = vmatmul.mubr.f32.gmra.mrb[0].mxu0 %v902
      %v1387 = vpop.f32.mrb[0].mxu0
      %v1388 = vadd.f32 0.0, %v1387
      %v1389 = vpop.f32.mrb[0].mxu0
      %v1390 = vadd.f32 0.0, %v1389
      %1391 = vmatprep.mubr.f32.mxu0 0.0
      %1392 = vmatmul.mubr.f32.gmra.mrb[0].mxu0 %v903
      %v1393 = vpop.f32.mrb[0].mxu0
      %v1394 = vadd.f32 0.0, %v1393
      %v1395 = vpop.f32.mrb[0].mxu0
      %v1396 = vadd.f32 0.0, %v1395
      %1397 = vmatprep.mubr.f32.mxu0 0.0
      %1398 = vmatmul.mubr.f32.gmra.mrb[0].mxu0 %v904
      %v1399 = vpop.f32.mrb[0].mxu0
      %v1400 = vadd.f32 0.0, %v1399
      %v1401 = vpop.f32.mrb[0].mxu0
      %v1402 = vadd.f32 0.0, %v1401
      %1403 = vmatprep.mubr.f32.mxu0 0.0
      %1404 = vmatmul.mubr.f32.gmra.mrb[0].mxu0 %v905
      %v1405 = vpop.f32.mrb[0].mxu0
      %v1406 = vadd.f32 0.0, %v1405
      %v1407 = vpop.f32.mrb[0].mxu0
      %v1408 = vadd.f32 0.0, %v1407
      %1409 = vmatprep.mubr.f32.mxu0 0.0
      %1410 = vmatmul.mubr.f32.gmra.mrb[0].mxu0 %v906
      %v1411 = vpop.f32.mrb[0].mxu0
      %v1412 = vadd.f32 0.0, %v1411
      %v1413 = vpop.f32.mrb[0].mxu0
      %v1414 = vadd.f32 0.0, %v1413
      %1415 = vmatprep.mubr.f32.mxu0 0.0
      %1416 = vmatmul.mubr.f32.gmra.mrb[0].mxu0 %v907
      %v1417 = vpop.f32.mrb[0].mxu0
      %v1418 = vadd.f32 0.0, %v1417
      %v1419 = vpop.f32.mrb[0].mxu0
      %v1420 = vadd.f32 0.0, %v1419
      %1421 = vdwg.mxu0
      %1422 = vst [vmem:[%s298] sm:$0xff] %v975
      %1423 = vst [vmem:[%s298 + $0x8] sm:$0xff] %v977
      %1424 = vst [vmem:[%s298 + $0x10] sm:$0xff] %v1232
      %vm1425 = vcmask 130048
      %1426 = vst.msk [vmem:[%s298 + $0x18] sm:$0xff] %vm1425, %v1234
      %1427 = vst [vmem:[%s298 + $0x20] sm:$0xff] %v981
      %1428 = vst [vmem:[%s298 + $0x28] sm:$0xff] %v983
      %1429 = vst [vmem:[%s298 + $0x30] sm:$0xff] %v1238
      %1430 = vst.msk [vmem:[%s298 + $0x38] sm:$0xff] %vm1425, %v1240
      %1431 = vst [vmem:[%s298 + $0x40] sm:$0xff] %v987
      %1432 = vst [vmem:[%s298 + $0x48] sm:$0xff] %v989
      %1433 = vst [vmem:[%s298 + $0x50] sm:$0xff] %v1244
      %1434 = vst.msk [vmem:[%s298 + $0x58] sm:$0xff] %vm1425, %v1246
      %1435 = vst [vmem:[%s298 + $0x60] sm:$0xff] %v993
      %1436 = vst [vmem:[%s298 + $0x68] sm:$0xff] %v995
      %1437 = vst [vmem:[%s298 + $0x70] sm:$0xff] %v1250
      %1438 = vst.msk [vmem:[%s298 + $0x78] sm:$0xff] %vm1425, %v1252
      %1439 = vst [vmem:[%s298 + $0x80] sm:$0xff] %v999
      %1440 = vst [vmem:[%s298 + $0x88] sm:$0xff] %v1001
      %1441 = vst [vmem:[%s298 + $0x90] sm:$0xff] %v1256
      %1442 = vst.msk [vmem:[%s298 + $0x98] sm:$0xff] %vm1425, %v1258
      %1443 = vst [vmem:[%s298 + $0xa0] sm:$0xff] %v1005
      %1444 = vst [vmem:[%s298 + $0xa8] sm:$0xff] %v1007
      %1445 = vst [vmem:[%s298 + $0xb0] sm:$0xff] %v1262
      %1446 = vst.msk [vmem:[%s298 + $0xb8] sm:$0xff] %vm1425, %v1264
      %1447 = vst [vmem:[%s298 + $0xc0] sm:$0xff] %v1011
      %1448 = vst [vmem:[%s298 + $0xc8] sm:$0xff] %v1013
      %1449 = vst [vmem:[%s298 + $0xd0] sm:$0xff] %v1268
      %1450 = vst.msk [vmem:[%s298 + $0xd8] sm:$0xff] %vm1425, %v1270
      %1451 = vst [vmem:[%s298 + $0xe0] sm:$0xff] %v1017
      %1452 = vst [vmem:[%s298 + $0xe8] sm:$0xff] %v1019
      %1453 = vst [vmem:[%s298 + $0xf0] sm:$0xff] %v1274
      %1454 = vst.msk [vmem:[%s298 + $0xf8] sm:$0xff] %vm1425, %v1276
      %1455 = vst [vmem:[%s298 + $0x100] sm:$0xff] %v1023
      %1456 = vst [vmem:[%s298 + $0x108] sm:$0xff] %v1025
      %1457 = vst [vmem:[%s298 + $0x110] sm:$0xff] %v1280
      %1458 = vst.msk [vmem:[%s298 + $0x118] sm:$0xff] %vm1425, %v1282
      %1459 = vst [vmem:[%s298 + $0x120] sm:$0xff] %v1029
      %1460 = vst [vmem:[%s298 + $0x128] sm:$0xff] %v1031
      %1461 = vst [vmem:[%s298 + $0x130] sm:$0xff] %v1286
      %1462 = vst.msk [vmem:[%s298 + $0x138] sm:$0xff] %vm1425, %v1288
      %1463 = vst [vmem:[%s298 + $0x140] sm:$0xff] %v1035
      %1464 = vst [vmem:[%s298 + $0x148] sm:$0xff] %v1037
      %1465 = vst [vmem:[%s298 + $0x150] sm:$0xff] %v1292
      %1466 = vst.msk [vmem:[%s298 + $0x158] sm:$0xff] %vm1425, %v1294
      %1467 = vst [vmem:[%s298 + $0x160] sm:$0xff] %v1041
      %1468 = vst [vmem:[%s298 + $0x168] sm:$0xff] %v1043
      %1469 = vst [vmem:[%s298 + $0x170] sm:$0xff] %v1298
      %1470 = vst.msk [vmem:[%s298 + $0x178] sm:$0xff] %vm1425, %v1300
      %1471 = vst [vmem:[%s298 + $0x180] sm:$0xff] %v1047
      %1472 = vst [vmem:[%s298 + $0x188] sm:$0xff] %v1049
      %1473 = vst [vmem:[%s298 + $0x190] sm:$0xff] %v1304
      %1474 = vst.msk [vmem:[%s298 + $0x198] sm:$0xff] %vm1425, %v1306
      %1475 = vst [vmem:[%s298 + $0x1a0] sm:$0xff] %v1053
      %1476 = vst [vmem:[%s298 + $0x1a8] sm:$0xff] %v1055
      %1477 = vst [vmem:[%s298 + $0x1b0] sm:$0xff] %v1310
      %1478 = vst.msk [vmem:[%s298 + $0x1b8] sm:$0xff] %vm1425, %v1312
      %1479 = vst [vmem:[%s298 + $0x1c0] sm:$0xff] %v1059
      %1480 = vst [vmem:[%s298 + $0x1c8] sm:$0xff] %v1061
      %1481 = vst [vmem:[%s298 + $0x1d0] sm:$0xff] %v1316
      %1482 = vst.msk [vmem:[%s298 + $0x1d8] sm:$0xff] %vm1425, %v1318
      %1483 = vst [vmem:[%s298 + $0x1e0] sm:$0xff] %v1065
      %1484 = vst [vmem:[%s298 + $0x1e8] sm:$0xff] %v1067
      %1485 = vst [vmem:[%s298 + $0x1f0] sm:$0xff] %v1322
      %1486 = vst.msk [vmem:[%s298 + $0x1f8] sm:$0xff] %vm1425, %v1324
      %1487 = vst [vmem:[%s298 + $0x200] sm:$0xff] %v1071
      %1488 = vst [vmem:[%s298 + $0x208] sm:$0xff] %v1073
      %1489 = vst [vmem:[%s298 + $0x210] sm:$0xff] %v1328
      %1490 = vst.msk [vmem:[%s298 + $0x218] sm:$0xff] %vm1425, %v1330
      %1491 = vst [vmem:[%s298 + $0x220] sm:$0xff] %v1077
      %1492 = vst [vmem:[%s298 + $0x228] sm:$0xff] %v1079
      %1493 = vst [vmem:[%s298 + $0x230] sm:$0xff] %v1334
      %1494 = vst.msk [vmem:[%s298 + $0x238] sm:$0xff] %vm1425, %v1336
      %1495 = vst [vmem:[%s298 + $0x240] sm:$0xff] %v1083
      %1496 = vst [vmem:[%s298 + $0x248] sm:$0xff] %v1085
      %1497 = vst [vmem:[%s298 + $0x250] sm:$0xff] %v1340
      %1498 = vst.msk [vmem:[%s298 + $0x258] sm:$0xff] %vm1425, %v1342
      %1499 = vst [vmem:[%s298 + $0x260] sm:$0xff] %v1089
      %1500 = vst [vmem:[%s298 + $0x268] sm:$0xff] %v1091
      %1501 = vst [vmem:[%s298 + $0x270] sm:$0xff] %v1346
      %1502 = vst.msk [vmem:[%s298 + $0x278] sm:$0xff] %vm1425, %v1348
      %1503 = vst [vmem:[%s298 + $0x280] sm:$0xff] %v1095
      %1504 = vst [vmem:[%s298 + $0x288] sm:$0xff] %v1097
      %1505 = vst [vmem:[%s298 + $0x290] sm:$0xff] %v1352
      %1506 = vst.msk [vmem:[%s298 + $0x298] sm:$0xff] %vm1425, %v1354
      %1507 = vst [vmem:[%s298 + $0x2a0] sm:$0xff] %v1101
      %1508 = vst [vmem:[%s298 + $0x2a8] sm:$0xff] %v1103
      %1509 = vst [vmem:[%s298 + $0x2b0] sm:$0xff] %v1358
      %1510 = vst.msk [vmem:[%s298 + $0x2b8] sm:$0xff] %vm1425, %v1360
      %1511 = vst [vmem:[%s298 + $0x2c0] sm:$0xff] %v1107
      %1512 = vst [vmem:[%s298 + $0x2c8] sm:$0xff] %v1109
      %1513 = vst [vmem:[%s298 + $0x2d0] sm:$0xff] %v1364
      %1514 = vst.msk [vmem:[%s298 + $0x2d8] sm:$0xff] %vm1425, %v1366
      %1515 = vst [vmem:[%s298 + $0x2e0] sm:$0xff] %v1113
      %1516 = vst [vmem:[%s298 + $0x2e8] sm:$0xff] %v1115
      %1517 = vst [vmem:[%s298 + $0x2f0] sm:$0xff] %v1370
      %1518 = vst.msk [vmem:[%s298 + $0x2f8] sm:$0xff] %vm1425, %v1372
      %1519 = vst [vmem:[%s298 + $0x300] sm:$0xff] %v1119
      %1520 = vst [vmem:[%s298 + $0x308] sm:$0xff] %v1121
      %1521 = vst [vmem:[%s298 + $0x310] sm:$0xff] %v1376
      %1522 = vst.msk [vmem:[%s298 + $0x318] sm:$0xff] %vm1425, %v1378
      %1523 = vst [vmem:[%s298 + $0x320] sm:$0xff] %v1125
      %1524 = vst [vmem:[%s298 + $0x328] sm:$0xff] %v1127
      %1525 = vst [vmem:[%s298 + $0x330] sm:$0xff] %v1382
      %1526 = vst.msk [vmem:[%s298 + $0x338] sm:$0xff] %vm1425, %v1384
      %1527 = vst [vmem:[%s298 + $0x340] sm:$0xff] %v1131
      %1528 = vst [vmem:[%s298 + $0x348] sm:$0xff] %v1133
      %1529 = vst [vmem:[%s298 + $0x350] sm:$0xff] %v1388
      %1530 = vst.msk [vmem:[%s298 + $0x358] sm:$0xff] %vm1425, %v1390
      %1531 = vst [vmem:[%s298 + $0x360] sm:$0xff] %v1137
      %1532 = vst [vmem:[%s298 + $0x368] sm:$0xff] %v1139
      %1533 = vst [vmem:[%s298 + $0x370] sm:$0xff] %v1394
      %1534 = vst.msk [vmem:[%s298 + $0x378] sm:$0xff] %vm1425, %v1396
      %1535 = vst [vmem:[%s298 + $0x380] sm:$0xff] %v1143
      %1536 = vst [vmem:[%s298 + $0x388] sm:$0xff] %v1145
      %1537 = vst [vmem:[%s298 + $0x390] sm:$0xff] %v1400
      %1538 = vst.msk [vmem:[%s298 + $0x398] sm:$0xff] %vm1425, %v1402
      %1539 = vst [vmem:[%s298 + $0x3a0] sm:$0xff] %v1149
      %1540 = vst [vmem:[%s298 + $0x3a8] sm:$0xff] %v1151
      %1541 = vst [vmem:[%s298 + $0x3b0] sm:$0xff] %v1406
      %1542 = vst.msk [vmem:[%s298 + $0x3b8] sm:$0xff] %vm1425, %v1408
      %1543 = vst [vmem:[%s298 + $0x3c0] sm:$0xff] %v1155
      %1544 = vst [vmem:[%s298 + $0x3c8] sm:$0xff] %v1157
      %1545 = vst [vmem:[%s298 + $0x3d0] sm:$0xff] %v1412
      %1546 = vst.msk [vmem:[%s298 + $0x3d8] sm:$0xff] %vm1425, %v1414
      %1547 = vst [vmem:[%s298 + $0x3e0] sm:$0xff] %v1161
      %1548 = vst [vmem:[%s298 + $0x3e8] sm:$0xff] %v1163
      %1549 = vst [vmem:[%s298 + $0x3f0] sm:$0xff] %v1418
      %1550 = vst.msk [vmem:[%s298 + $0x3f8] sm:$0xff] %vm1425, %v1420
      %s1551 = smul.u32 4, %s21
      %p1552 = scmp.lt.s32.totalorder %s20, 1
      %s1553 = scalar_select %p1552, %s20, 1
      %p1554 = scmp.lt.s32.totalorder %s1551, 3
      %s1555 = scalar_select %p1554, %s1551, 3
      %s1556 = smul.addr %s1553, 128
      %s1557 = sadd.s32 %s1555, %s1556
      %s1558 = smul.addr %s1557, 8
      %s1559 = scalar_lea.vmem %s5, %s1558
      // Predicated region
      $region41: #{module_forward.3} parent=39 // pred_check
        %p1560 = pneg %p167
      $region42: #{module_forward.3} parent=39 // pred_check_branch
        %1562 = sbr.rel (%p1560) target = $region44
      $region43: #{module_forward.3} parent=39 // pred_region
        %s1563 = smul.u32 4, %s21
      $region44: #{module_forward.3} parent=39 // pred_fallthru
        _
    $region40: #{module_forward.3} parent=5 // pred_fallthru
      _
    %p1564 = scmp.le.s32.totalorder 2, %s11
    // Predicated region
    $region45: #{module_forward.3} parent=5 // pred_check
      %p1565 = pneg %p1564
    $region46: #{module_forward.3} parent=5 // pred_check_branch
      %1567 = sbr.rel (%p1565) target = $region48
    $region47: #{module_forward.3} parent=5 // pred_region
      %s1568 = ssub.s32 %s11, 2
      // Predicated region
      $region49: #{module_forward.3} parent=47 // pred_check
        %p1569 = pneg %p173
      $region50: #{module_forward.3} parent=47 // pred_check_branch
        %1571 = sbr.rel (%p1569) target = $region52
      $region51: #{module_forward.3} parent=47 // pred_region
        %s1572 = smul.u32 4, %s23
        %p1573 = scmp.lt.s32.totalorder %s22, 1
        %s1574 = scalar_select %p1573, %s22, 1
        %p1575 = scmp.lt.s32.totalorder %s1572, 3
        %s1576 = scalar_select %p1575, %s1572, 3
        %s1577 = smul.addr %s1574, 128
        %s1578 = sadd.s32 %s1576, %s1577
        %s1579 = smul.addr %s1578, 8
        %s1580 = scalar_lea.vmem %s5, %s1579
      $region52: #{module_forward.3} parent=47 // pred_fallthru
        _
    $region48: #{module_forward.3} parent=5 // pred_fallthru
      _
  $region6: #{module_forward.3} parent=0 // loop_footer
    %s15 = sadd.s32 1, %s11
  $region7: #{module_forward.3} parent=0 // loop_footer_branch
    %10 = sbr.rel target = $region3
  $region8: #{module_forward.3} parent=0 // loop_exit
    _

</llo_original>
